<compile_context>
chip_gen: v5e
topology: v5e:2x2
jax: 0.10.0
libtpu: 0.0.40
codegen_flags: <defaults>
</compile_context>

<pallas_src>
import functools

import jax
import jax.numpy as jnp
import numpy as np
from jax import lax
from jax.experimental import pallas as pl
from jax.experimental.pallas import tpu as pltpu


# ----------------------------- activations (usable in-kernel) -----------------------------
def _activation(y, act):
    if act == "relu6":
        return jnp.clip(y, 0.0, 6.0)
    if act == "hardswish":
        return y * jnp.clip(y + 3.0, 0.0, 6.0) * (1.0 / 6.0)
    return y  # identity


def _aligned(i, m):
    """Multiply-and-hint helper for strip starts inside fori_loop bodies."""
    idx = i * m
    return pl.multiple_of(idx, m) if (m % 8 == 0) else idx


# ------------------- fused kernel: expand -> depthwise -> SE -> project (+res) -------------------
def _fused_block_kernel(*refs, k, stride, pad, H, W, Ho, Wo, in_ch, exp_c, out_ch,
                        act, use_se, add_residual, strip_h):
    if use_se:
        (x_ref, w_exp_ref, b_exp_ref, w_dw_ref, b_dw_ref,
         w_se1_ref, b_se1_ref, w_se2_ref, b_se2_ref,
         w_proj_ref, b_proj_ref, o_ref, e_ref, y_ref) = refs
    else:
        (x_ref, w_exp_ref, b_exp_ref, w_dw_ref, b_dw_ref,
         w_proj_ref, b_proj_ref, o_ref, e_ref, y_ref) = refs

    f32 = jnp.float32
    Hp, Wp = H + 2 * pad, W + 2 * pad

    # Hoist small weight/bias loads (and per-tap weight rows) out of the strip loops.
    w_exp = w_exp_ref[...]
    b_exp = b_exp_ref[...]
    w_dw_all = w_dw_ref[...].astype(f32)                    # (k*k, exp), BN folded
    w_taps = [w_dw_all[t] for t in range(k * k)]            # each (exp,)
    b_dw = b_dw_ref[...]
    w_proj = w_proj_ref[...]
    b_proj = b_proj_ref[...]

    # ---- zero the spatial halo of the expand scratch once (the PyTorch depthwise
    #      conv zero-pads the *activated* expansion, so the halo must be exact 0) ----
    if pad > 0:
        zr = jnp.zeros((pad, Wp, exp_c), e_ref.dtype)
        e_ref[0:pad, :, :] = zr
        e_ref[pad + H:Hp, :, :] = zr
        zc = jnp.zeros((Hp, pad, exp_c), e_ref.dtype)
        e_ref[:, 0:pad, :] = zc
        e_ref[:, pad + W:Wp, :] = zc

    # ---- expand 1x1 (+folded BN, +NL) on the MXU, written strip-wise into VMEM ----
    def expand_strip(r0, sh):
        x = x_ref[pl.ds(r0, sh), :, :]                                   # (sh, W, Cin)
        y = jnp.dot(x.reshape(sh * W, in_ch), w_exp,
                    preferred_element_type=f32)                          # MXU
        y = _activation(y.reshape(sh, W, exp_c) + b_exp, act)
        e_ref[pl.ds(pad + r0, sh), pad:pad + W, :] = y.astype(e_ref.dtype)

    SHE = min(strip_h, H)
    nfe, reme = H // SHE, H % SHE

    def expand_body(i, carry):
        expand_strip(_aligned(i, SHE), SHE)
        return carry

    lax.fori_loop(0, nfe, expand_body, 0)
    if reme:
        expand_strip(nfe * SHE, reme)

    # ---- depthwise k x k (+folded BN, +NL) in output-row strips; partial SE pool ----
    span_c = (Wo - 1) * stride + 1

    def dw_strip(r0, sh):
        span_r = (sh - 1) * stride + 1
        acc = jnp.zeros((sh, Wo, exp_c), f32)
        for kh in range(k):
            for kw in range(k):
                blk = e_ref[pl.ds(r0 * stride + kh, span_r), kw:kw + span_c, :]
                if stride > 1:
                    blk = blk[::stride, ::stride, :]
                acc = acc + blk.astype(f32) * w_taps[kh * k + kw]
        y = _activation(acc + b_dw, act)
        y_ref[pl.ds(r0, sh), :, :] = y.astype(y_ref.dtype)
        if use_se:
            return jnp.sum(y, axis=(0, 1)).reshape(1, exp_c)
        return None

    SH = min(strip_h, Ho)
    nf, rem = Ho // SH, Ho % SH

    def dw_body(i, pooled):
        part = dw_strip(_aligned(i, SH), SH)
        return pooled + part if use_se else pooled

    pooled = lax.fori_loop(0, nf, dw_body, jnp.zeros((1, exp_c), f32))
    if rem:
        part = dw_strip(nf * SH, rem)
        if use_se:
            pooled = pooled + part

    # ---- squeeze-excite on the pooled vector (tiny matmuls) ----
    if use_se:
        pooled = pooled * (1.0 / (Ho * Wo))
        h = jnp.dot(pooled, w_se1_ref[...].astype(f32),
                    preferred_element_type=f32) + b_se1_ref[...]
        h = jnp.maximum(h, 0.0)                                          # ReLU
        s = jnp.dot(h, w_se2_ref[...].astype(f32),
                    preferred_element_type=f32) + b_se2_ref[...]
        se_scale = jnp.clip(s * (1.0 / 6.0) + 0.5, 0.0, 1.0)             # Hardsigmoid (1, exp)

    # ---- project 1x1 (+folded BN, +fused residual) on the MXU, strip-wise store ----
    def proj_strip(r0, sh):
        y = y_ref[pl.ds(r0, sh), :, :].astype(f32)                       # (sh, Wo, exp)
        if use_se:
            y = y * se_scale
        out = jnp.dot(y.reshape(sh * Wo, exp_c), w_proj,
                      preferred_element_type=f32) + b_proj               # (sh*Wo, out)
        if add_residual:
            out = out + x_ref[pl.ds(r0, sh), :, :].astype(f32).reshape(sh * W, in_ch)
        o_ref[pl.ds(r0, sh), :, :] = out.reshape(sh, Wo, out_ch).astype(o_ref.dtype)

    def proj_body(i, carry):
        proj_strip(_aligned(i, SH), SH)
        return carry

    lax.fori_loop(0, nf, proj_body, 0)
    if rem:
        proj_strip(nf * SH, rem)


# ----------------------------- full block wrapper -----------------------------
def mobilenetv3_block(x_nchw, params, cfg, compute_dtype=jnp.float32, strip_h=8):
    # compute_dtype=jnp.bfloat16 halves HBM/VMEM traffic on v6e/v7x (accumulation
    # stays f32 in-kernel); kept f32 here so the reference check stays tight.
    in_ch, out_ch = cfg["in_channels"], cfg["out_channels"]
    k, exp_c, stride = cfg["kernel_size"], cfg["exp_size"], cfg["stride"]
    use_se = bool(cfg["use_se"])
    act = "relu6" if cfg["nl"] == "RE" else "hardswish"
    add_residual = (in_ch == out_ch and stride == 1)

    N, _, H, W = x_nchw.shape
    pad = k // 2
    Hp, Wp = H + 2 * pad, W + 2 * pad
    Ho = (H + 2 * pad - k) // stride + 1
    Wo = (W + 2 * pad - k) // stride + 1
    cr = max(exp_c // 4, 1)

    # NCHW -> NHWC once at the boundary (channels on the lane axis).  No jnp.pad
    # round trip: the halo is handled in-kernel via the zeroed VMEM scratch.
    # TODO(synk): keep the whole network NHWC end-to-end to drop these transposes.
    x = jnp.transpose(x_nchw, (0, 2, 3, 1)).astype(compute_dtype)

    # Fold the (eval-mode) BatchNorm scales into the conv weights once here.
    cd = compute_dtype
    w_exp = (params["w_exp"] * params["s_exp"][None, :]).astype(cd)
    b_exp = params["b_exp"].reshape(1, exp_c).astype(jnp.float32)
    w_dw = (params["w_dw"] * params["s_dw"][None, None, :]).reshape(k * k, exp_c).astype(cd)
    b_dw = params["b_dw"].reshape(1, exp_c).astype(jnp.float32)
    w_proj = (params["w_proj"] * params["s_proj"][None, :]).astype(cd)
    b_proj = params["b_proj"].reshape(1, out_ch).astype(jnp.float32)

    def _full(shape):
        nd = len(shape)
        return pl.BlockSpec(shape, lambda n, _nd=nd: (0,) * _nd)

    ins = [x, w_exp, b_exp, w_dw, b_dw]
    in_specs = [pl.BlockSpec((None, H, W, in_ch), lambda n: (n, 0, 0, 0)),
                _full((in_ch, exp_c)), _full((1, exp_c)),
                _full((k * k, exp_c)), _full((1, exp_c))]
    if use_se:  # only ship SE weights when they are actually used
        w_se1 = params["w_se1"].astype(cd)
        b_se1 = params["b_se1"].reshape(1, cr).astype(jnp.float32)
        w_se2 = params["w_se2"].astype(cd)
        b_se2 = params["b_se2"].reshape(1, exp_c).astype(jnp.float32)
        ins += [w_se1, b_se1, w_se2, b_se2]
        in_specs += [_full((exp_c, cr)), _full((1, cr)),
                     _full((cr, exp_c)), _full((1, exp_c))]
    ins += [w_proj, b_proj]
    in_specs += [_full((exp_c, out_ch)), _full((1, out_ch))]

    kernel = functools.partial(
        _fused_block_kernel, k=k, stride=stride, pad=pad, H=H, W=W, Ho=Ho, Wo=Wo,
        in_ch=in_ch, exp_c=exp_c, out_ch=out_ch, act=act, use_se=use_se,
        add_residual=add_residual, strip_h=strip_h)

    out = pl.pallas_call(
        kernel,
        out_shape=jax.ShapeDtypeStruct((N, Ho, Wo, out_ch), jnp.float32),
        grid=(N,),
        in_specs=in_specs,
        out_specs=pl.BlockSpec((None, Ho, Wo, out_ch), lambda n: (n, 0, 0, 0)),
        scratch_shapes=[pltpu.VMEM((Hp, Wp, exp_c), cd),    # expanded activation (halo'd)
                        pltpu.VMEM((Ho, Wo, exp_c), cd)],   # depthwise output (for SE+project)
        compiler_params=pltpu.CompilerParams(
            dimension_semantics=("parallel",),
            # Needed on v5e (16 MiB default scoped limit); plenty for these shapes.
            # TODO(synk): H-strip grid axis + two-pass SE for 112x112-class maps on v7x.
            vmem_limit_bytes=32 * 1024 * 1024,
        ),
    )(*ins)

    return jnp.transpose(out, (0, 3, 1, 2))                 # NHWC -> NCHW


# ----------------------------- deterministic params (folded BN) -----------------------------
def init_params(key, cfg):
    in_ch, out_ch = cfg["in_channels"], cfg["out_channels"]
    k, exp = cfg["kernel_size"], cfg["exp_size"]
    cr = max(exp // 4, 1)
    keys = jax.random.split(key, 10)

    def bn(kk, c):
        k1, k2, k3, k4 = jax.random.split(kk, 4)
        gamma = jax.random.uniform(k1, (c,), minval=0.5, maxval=1.5)
        beta = jax.random.normal(k2, (c,)) * 0.1
        mean = jax.random.normal(k3, (c,)) * 0.1
        var = jax.random.uniform(k4, (c,), minval=0.5, maxval=1.5)
        scale = gamma / jnp.sqrt(var + 1e-5)
        bias = beta - mean * scale
        return scale.astype(jnp.float32), bias.astype(jnp.float32)

    s_exp, b_exp = bn(keys[1], exp)
    s_dw, b_dw = bn(keys[3], exp)
    s_proj, b_proj = bn(keys[9], out_ch)
    return dict(
        w_exp=jax.random.normal(keys[0], (in_ch, exp)) * 0.1,
        s_exp=s_exp, b_exp=b_exp,
        w_dw=jax.random.normal(keys[2], (k, k, exp)) * 0.1,
        s_dw=s_dw, b_dw=b_dw,
        w_se1=jax.random.normal(keys[4], (exp, cr)) * 0.1,
        b_se1=jax.random.normal(keys[5], (cr,)) * 0.1,
        w_se2=jax.random.normal(keys[6], (cr, exp)) * 0.1,
        b_se2=jax.random.normal(keys[7], (exp,)) * 0.1,
        w_proj=jax.random.normal(keys[8], (exp, out_ch)) * 0.1,
        s_proj=s_proj, b_proj=b_proj,
    )


# ----------------------------- plain-JAX reference for verification -----------------------------
def ref_forward(x_nchw, params, cfg):
    k, stride = cfg["kernel_size"], cfg["stride"]
    nl = "relu6" if cfg["nl"] == "RE" else "hardswish"
    x = jnp.transpose(x_nchw, (0, 2, 3, 1))
    y = jnp.einsum("nhwc,cd->nhwd", x, params["w_exp"]) * params["s_exp"] + params["b_exp"]
    y = _activation(y, nl)
    p = k // 2
    yp = jnp.pad(y, ((0, 0), (p, p), (p, p), (0, 0)))
    N, H, W, C = y.shape
    Hout = (H + 2 * p - k) // stride + 1
    Wout = (W + 2 * p - k) // stride + 1
    acc = jnp.zeros((N, Hout, Wout, C), jnp.float32)
    for kh in range(k):
        for kw in range(k):
            acc = acc + yp[:, kh:kh + (Hout - 1) * stride + 1:stride,
                             kw:kw + (Wout - 1) * stride + 1:stride, :] * params["w_dw"][kh, kw]
    y = _activation(acc * params["s_dw"] + params["b_dw"], nl)
    if cfg["use_se"]:
        pooled = jnp.mean(y, axis=(1, 2))
        h = jnp.maximum(pooled @ params["w_se1"] + params["b_se1"], 0.0)
        s = jnp.clip((h @ params["w_se2"] + params["b_se2"]) / 6.0 + 0.5, 0.0, 1.0)
        y = y * s[:, None, None, :]
    out = jnp.einsum("nhwc,cd->nhwd", y, params["w_proj"]) * params["s_proj"] + params["b_proj"]
    if cfg["in_channels"] == cfg["out_channels"] and stride == 1:
        out = out + x
    return jnp.transpose(out, (0, 3, 1, 2))


if __name__ == "__main__":
    cfg = dict(in_channels=8, out_channels=8, kernel_size=3, exp_size=16,
               use_se=True, nl="HS", stride=1)
    key = jax.random.PRNGKey(0)
    kx, kp = jax.random.split(key)
    x = jax.random.normal(kx, (2, cfg["in_channels"], 16, 16), dtype=jnp.float32)  # NCHW like PyTorch
    params = init_params(kp, cfg)

    out = mobilenetv3_block(x, params, cfg)
    out = jax.block_until_ready(out)

    ref = ref_forward(x, params, cfg)
    np.testing.assert_allclose(np.asarray(out), np.asarray(ref), rtol=1e-4, atol=1e-4)
    print("KERNEL_OK")
</pallas_src>

<mosaic_0001>
module attributes {stable_mosaic.version = 11 : i64} {
  func.func @_fused_block_kernel(%arg0: i32, %arg1: memref<1x16x16x8xf32, #tpu.memory_space<vmem>>, %arg2: memref<8x16xf32, #tpu.memory_space<vmem>>, %arg3: memref<1x16xf32, #tpu.memory_space<vmem>>, %arg4: memref<9x16xf32, #tpu.memory_space<vmem>>, %arg5: memref<1x16xf32, #tpu.memory_space<vmem>>, %arg6: memref<16x4xf32, #tpu.memory_space<vmem>>, %arg7: memref<1x4xf32, #tpu.memory_space<vmem>>, %arg8: memref<4x16xf32, #tpu.memory_space<vmem>>, %arg9: memref<1x16xf32, #tpu.memory_space<vmem>>, %arg10: memref<16x8xf32, #tpu.memory_space<vmem>>, %arg11: memref<1x8xf32, #tpu.memory_space<vmem>>, %arg12: memref<1x16x16x8xf32, #tpu.memory_space<vmem>>, %arg13: memref<18x18x16xf32, #tpu.memory_space<vmem>>, %arg14: memref<16x16x16xf32, #tpu.memory_space<vmem>>) attributes {dimension_semantics = [#tpu.dimension_semantics<parallel>], iteration_bounds = array<i64: 2>, scalar_prefetch = 0 : i64, scratch_operands = 2 : i64, tpu.core_type = #tpu.core_type<tc>, window_params = [{transform_indices = @transform_0, window_bounds = array<i64: 1, 16, 16, 8>}, {pipeline_mode = #tpu.pipeline_mode<synchronous>, transform_indices = @transform_1, window_bounds = array<i64: 8, 16>}, {pipeline_mode = #tpu.pipeline_mode<synchronous>, transform_indices = @transform_2, window_bounds = array<i64: 1, 16>}, {pipeline_mode = #tpu.pipeline_mode<synchronous>, transform_indices = @transform_3, window_bounds = array<i64: 9, 16>}, {pipeline_mode = #tpu.pipeline_mode<synchronous>, transform_indices = @transform_4, window_bounds = array<i64: 1, 16>}, {pipeline_mode = #tpu.pipeline_mode<synchronous>, transform_indices = @transform_5, window_bounds = array<i64: 16, 4>}, {pipeline_mode = #tpu.pipeline_mode<synchronous>, transform_indices = @transform_6, window_bounds = array<i64: 1, 4>}, {pipeline_mode = #tpu.pipeline_mode<synchronous>, transform_indices = @transform_7, window_bounds = array<i64: 4, 16>}, {pipeline_mode = #tpu.pipeline_mode<synchronous>, transform_indices = @transform_8, window_bounds = array<i64: 1, 16>}, {pipeline_mode = #tpu.pipeline_mode<synchronous>, transform_indices = @transform_9, window_bounds = array<i64: 16, 8>}, {pipeline_mode = #tpu.pipeline_mode<synchronous>, transform_indices = @transform_10, window_bounds = array<i64: 1, 8>}, {transform_indices = @transform_11, window_bounds = array<i64: 1, 16, 16, 8>}]} {
    %c0 = arith.constant 0 : index
    %c0_0 = arith.constant 0 : index
    %0 = vector.load %arg2[%c0, %c0_0] : memref<8x16xf32, #tpu.memory_space<vmem>>, vector<8x16xf32>
    %c0_1 = arith.constant 0 : index
    %c0_2 = arith.constant 0 : index
    %1 = vector.load %arg3[%c0_1, %c0_2] : memref<1x16xf32, #tpu.memory_space<vmem>>, vector<1x16xf32>
    %c0_3 = arith.constant 0 : index
    %c0_4 = arith.constant 0 : index
    %2 = vector.load %arg4[%c0_3, %c0_4] : memref<9x16xf32, #tpu.memory_space<vmem>>, vector<9x16xf32>
    %3 = vector.extract_strided_slice %2 {offsets = [0, 0], sizes = [1, 16], strides = [1, 1]} : vector<9x16xf32> to vector<1x16xf32>
    %4 = vector.shape_cast %3 : vector<1x16xf32> to vector<16xf32>
    %5 = vector.extract_strided_slice %2 {offsets = [1, 0], sizes = [1, 16], strides = [1, 1]} : vector<9x16xf32> to vector<1x16xf32>
    %6 = vector.shape_cast %5 : vector<1x16xf32> to vector<16xf32>
    %7 = vector.extract_strided_slice %2 {offsets = [2, 0], sizes = [1, 16], strides = [1, 1]} : vector<9x16xf32> to vector<1x16xf32>
    %8 = vector.shape_cast %7 : vector<1x16xf32> to vector<16xf32>
    %9 = vector.extract_strided_slice %2 {offsets = [3, 0], sizes = [1, 16], strides = [1, 1]} : vector<9x16xf32> to vector<1x16xf32>
    %10 = vector.shape_cast %9 : vector<1x16xf32> to vector<16xf32>
    %11 = vector.extract_strided_slice %2 {offsets = [4, 0], sizes = [1, 16], strides = [1, 1]} : vector<9x16xf32> to vector<1x16xf32>
    %12 = vector.shape_cast %11 : vector<1x16xf32> to vector<16xf32>
    %13 = vector.extract_strided_slice %2 {offsets = [5, 0], sizes = [1, 16], strides = [1, 1]} : vector<9x16xf32> to vector<1x16xf32>
    %14 = vector.shape_cast %13 : vector<1x16xf32> to vector<16xf32>
    %15 = vector.extract_strided_slice %2 {offsets = [6, 0], sizes = [1, 16], strides = [1, 1]} : vector<9x16xf32> to vector<1x16xf32>
    %16 = vector.shape_cast %15 : vector<1x16xf32> to vector<16xf32>
    %17 = vector.extract_strided_slice %2 {offsets = [7, 0], sizes = [1, 16], strides = [1, 1]} : vector<9x16xf32> to vector<1x16xf32>
    %18 = vector.shape_cast %17 : vector<1x16xf32> to vector<16xf32>
    %19 = vector.extract_strided_slice %2 {offsets = [8, 0], sizes = [1, 16], strides = [1, 1]} : vector<9x16xf32> to vector<1x16xf32>
    %20 = vector.shape_cast %19 : vector<1x16xf32> to vector<16xf32>
    %c0_5 = arith.constant 0 : index
    %c0_6 = arith.constant 0 : index
    %21 = vector.load %arg5[%c0_5, %c0_6] : memref<1x16xf32, #tpu.memory_space<vmem>>, vector<1x16xf32>
    %c0_7 = arith.constant 0 : index
    %c0_8 = arith.constant 0 : index
    %22 = vector.load %arg10[%c0_7, %c0_8] : memref<16x8xf32, #tpu.memory_space<vmem>>, vector<16x8xf32>
    %c0_9 = arith.constant 0 : index
    %c0_10 = arith.constant 0 : index
    %23 = vector.load %arg11[%c0_9, %c0_10] : memref<1x8xf32, #tpu.memory_space<vmem>>, vector<1x8xf32>
    %cst = arith.constant 0.000000e+00 : f32
    %24 = vector.broadcast %cst : f32 to vector<1x18x16xf32>
    %c0_11 = arith.constant 0 : index
    %c0_12 = arith.constant 0 : index
    %c0_13 = arith.constant 0 : index
    %25 = vector.load %arg13[%c0_11, %c0_12, %c0_13] : memref<18x18x16xf32, #tpu.memory_space<vmem>>, vector<1x18x16xf32>
    tpu.vector_store %arg13[%c0_11, %c0_12, %c0_13], %24 {strides = array<i32>} : memref<18x18x16xf32, #tpu.memory_space<vmem>>, vector<1x18x16xf32>,
    %c17 = arith.constant 17 : index
    %c0_14 = arith.constant 0 : index
    %c0_15 = arith.constant 0 : index
    %26 = vector.load %arg13[%c17, %c0_14, %c0_15] : memref<18x18x16xf32, #tpu.memory_space<vmem>>, vector<1x18x16xf32>
    tpu.vector_store %arg13[%c17, %c0_14, %c0_15], %24 {strides = array<i32>} : memref<18x18x16xf32, #tpu.memory_space<vmem>>, vector<1x18x16xf32>,
    %cst_16 = arith.constant 0.000000e+00 : f32
    %27 = vector.broadcast %cst_16 : f32 to vector<18x1x16xf32>
    %c0_17 = arith.constant 0 : index
    %c0_18 = arith.constant 0 : index
    %c0_19 = arith.constant 0 : index
    %28 = vector.load %arg13[%c0_17, %c0_18, %c0_19] : memref<18x18x16xf32, #tpu.memory_space<vmem>>, vector<18x1x16xf32>
    tpu.vector_store %arg13[%c0_17, %c0_18, %c0_19], %27 {strides = array<i32>} : memref<18x18x16xf32, #tpu.memory_space<vmem>>, vector<18x1x16xf32>,
    %c0_20 = arith.constant 0 : index
    %c17_21 = arith.constant 17 : index
    %c0_22 = arith.constant 0 : index
    %29 = vector.load %arg13[%c0_20, %c17_21, %c0_22] : memref<18x18x16xf32, #tpu.memory_space<vmem>>, vector<18x1x16xf32>
    tpu.vector_store %arg13[%c0_20, %c17_21, %c0_22], %27 {strides = array<i32>} : memref<18x18x16xf32, #tpu.memory_space<vmem>>, vector<18x1x16xf32>,
    %c0_i32 = arith.constant 0 : i32
    %c2_i32 = arith.constant 2 : i32
    %30 = arith.addi %c0_i32, %c2_i32 : i32
    %c1_i32 = arith.constant 1 : i32
    scf.for %arg15 = %c0_i32 to %30 step %c1_i32  : i32 {
      %c8_i32 = arith.constant 8 : i32
      %55 = arith.muli %arg15, %c8_i32 : i32
      %56 = tpu.assume_multiple %55, 8 : i32
      %c0_49 = arith.constant 0 : index
      %57 = arith.index_cast %56 : i32 to index
      %c0_50 = arith.constant 0 : index
      %c0_51 = arith.constant 0 : index
      %58 = vector.load %arg1[%c0_49, %57, %c0_50, %c0_51] : memref<1x16x16x8xf32, #tpu.memory_space<vmem>>, vector<1x8x16x8xf32>
      %59 = vector.shape_cast %58 : vector<1x8x16x8xf32> to vector<8x16x8xf32>
      %60 = vector.shape_cast %59 : vector<8x16x8xf32> to vector<128x8xf32>
      %cst_52 = arith.constant dense<0.000000e+00> : vector<128x16xf32>
      %61 = tpu.matmul %60, %0, %cst_52 {dimension_numbers = #tpu.dot_dimension_numbers<[1], [0], [0], [1], [0, 0, 1, 1], [], []>} : vector<128x8xf32>, vector<8x16xf32>, vector<128x16xf32> -> vector<128x16xf32>
      %62 = vector.shape_cast %61 : vector<128x16xf32> to vector<8x16x16xf32>
      %63 = vector.shape_cast %1 : vector<1x16xf32> to vector<1x1x16xf32>
      %64 = vector.broadcast %63 : vector<1x1x16xf32> to vector<8x16x16xf32>
      %65 = arith.addf %62, %64 : vector<8x16x16xf32>
      %cst_53 = arith.constant 3.000000e+00 : f32
      %66 = vector.broadcast %cst_53 : f32 to vector<8x16x16xf32>
      %67 = arith.addf %65, %66 : vector<8x16x16xf32>
      %cst_54 = arith.constant 0.000000e+00 : f32
      %cst_55 = arith.constant 6.000000e+00 : f32
      %68 = vector.broadcast %cst_54 : f32 to vector<8x16x16xf32>
      %69 = arith.maximumf %68, %67 : vector<8x16x16xf32>
      %70 = vector.broadcast %cst_55 : f32 to vector<8x16x16xf32>
      %71 = arith.minimumf %70, %69 : vector<8x16x16xf32>
      %72 = arith.mulf %65, %71 : vector<8x16x16xf32>
      %cst_56 = arith.constant 0.166666672 : f32
      %73 = vector.broadcast %cst_56 : f32 to vector<8x16x16xf32>
      %74 = arith.mulf %72, %73 : vector<8x16x16xf32>
      %c1_i32_57 = arith.constant 1 : i32
      %75 = arith.addi %c1_i32_57, %56 : i32
      %76 = arith.index_cast %75 : i32 to index
      %c1 = arith.constant 1 : index
      %c0_58 = arith.constant 0 : index
      %77 = vector.load %arg13[%76, %c1, %c0_58] : memref<18x18x16xf32, #tpu.memory_space<vmem>>, vector<8x16x16xf32>
      tpu.vector_store %arg13[%76, %c1, %c0_58], %74 {strides = array<i32>} : memref<18x18x16xf32, #tpu.memory_space<vmem>>, vector<8x16x16xf32>,
    }
    %c2_i32_23 = arith.constant 2 : i32
    %cst_24 = arith.constant 0.000000e+00 : f32
    %31 = vector.broadcast %cst_24 : f32 to vector<1x16xf32>
    %c0_i32_25 = arith.constant 0 : i32
    %c2_i32_26 = arith.constant 2 : i32
    %32 = arith.addi %c0_i32_25, %c2_i32_26 : i32
    %c1_i32_27 = arith.constant 1 : i32
    %33 = scf.for %arg15 = %c0_i32_25 to %32 step %c1_i32_27 iter_args(%arg16 = %31) -> (vector<1x16xf32>)  : i32 {
      %c8_i32 = arith.constant 8 : i32
      %55 = arith.muli %arg15, %c8_i32 : i32
      %56 = tpu.assume_multiple %55, 8 : i32
      %cst_49 = arith.constant 0.000000e+00 : f32
      %57 = vector.broadcast %cst_49 : f32 to vector<8x16x16xf32>
      %c1_i32_50 = arith.constant 1 : i32
      %58 = arith.muli %56, %c1_i32_50 : i32
      %c0_i32_51 = arith.constant 0 : i32
      %59 = arith.addi %58, %c0_i32_51 : i32
      %60 = arith.index_cast %59 : i32 to index
      %c0_52 = arith.constant 0 : index
      %c0_53 = arith.constant 0 : index
      %61 = vector.load %arg13[%60, %c0_52, %c0_53] : memref<18x18x16xf32, #tpu.memory_space<vmem>>, vector<8x16x16xf32>
      %62 = vector.shape_cast %4 : vector<16xf32> to vector<1x1x16xf32>
      %63 = vector.broadcast %62 : vector<1x1x16xf32> to vector<8x16x16xf32>
      %64 = arith.mulf %61, %63 : vector<8x16x16xf32>
      %65 = arith.addf %57, %64 : vector<8x16x16xf32>
      %c1_i32_54 = arith.constant 1 : i32
      %66 = arith.muli %56, %c1_i32_54 : i32
      %c0_i32_55 = arith.constant 0 : i32
      %67 = arith.addi %66, %c0_i32_55 : i32
      %68 = arith.index_cast %67 : i32 to index
      %c1 = arith.constant 1 : index
      %c0_56 = arith.constant 0 : index
      %69 = vector.load %arg13[%68, %c1, %c0_56] : memref<18x18x16xf32, #tpu.memory_space<vmem>>, vector<8x16x16xf32>
      %70 = vector.shape_cast %6 : vector<16xf32> to vector<1x1x16xf32>
      %71 = vector.broadcast %70 : vector<1x1x16xf32> to vector<8x16x16xf32>
      %72 = arith.mulf %69, %71 : vector<8x16x16xf32>
      %73 = arith.addf %65, %72 : vector<8x16x16xf32>
      %c1_i32_57 = arith.constant 1 : i32
      %74 = arith.muli %56, %c1_i32_57 : i32
      %c0_i32_58 = arith.constant 0 : i32
      %75 = arith.addi %74, %c0_i32_58 : i32
      %76 = arith.index_cast %75 : i32 to index
      %c2 = arith.constant 2 : index
      %c0_59 = arith.constant 0 : index
      %77 = vector.load %arg13[%76, %c2, %c0_59] : memref<18x18x16xf32, #tpu.memory_space<vmem>>, vector<8x16x16xf32>
      %78 = vector.shape_cast %8 : vector<16xf32> to vector<1x1x16xf32>
      %79 = vector.broadcast %78 : vector<1x1x16xf32> to vector<8x16x16xf32>
      %80 = arith.mulf %77, %79 : vector<8x16x16xf32>
      %81 = arith.addf %73, %80 : vector<8x16x16xf32>
      %c1_i32_60 = arith.constant 1 : i32
      %82 = arith.muli %56, %c1_i32_60 : i32
      %c1_i32_61 = arith.constant 1 : i32
      %83 = arith.addi %82, %c1_i32_61 : i32
      %84 = arith.index_cast %83 : i32 to index
      %c0_62 = arith.constant 0 : index
      %c0_63 = arith.constant 0 : index
      %85 = vector.load %arg13[%84, %c0_62, %c0_63] : memref<18x18x16xf32, #tpu.memory_space<vmem>>, vector<8x16x16xf32>
      %86 = vector.shape_cast %10 : vector<16xf32> to vector<1x1x16xf32>
      %87 = vector.broadcast %86 : vector<1x1x16xf32> to vector<8x16x16xf32>
      %88 = arith.mulf %85, %87 : vector<8x16x16xf32>
      %89 = arith.addf %81, %88 : vector<8x16x16xf32>
      %c1_i32_64 = arith.constant 1 : i32
      %90 = arith.muli %56, %c1_i32_64 : i32
      %c1_i32_65 = arith.constant 1 : i32
      %91 = arith.addi %90, %c1_i32_65 : i32
      %92 = arith.index_cast %91 : i32 to index
      %c1_66 = arith.constant 1 : index
      %c0_67 = arith.constant 0 : index
      %93 = vector.load %arg13[%92, %c1_66, %c0_67] : memref<18x18x16xf32, #tpu.memory_space<vmem>>, vector<8x16x16xf32>
      %94 = vector.shape_cast %12 : vector<16xf32> to vector<1x1x16xf32>
      %95 = vector.broadcast %94 : vector<1x1x16xf32> to vector<8x16x16xf32>
      %96 = arith.mulf %93, %95 : vector<8x16x16xf32>
      %97 = arith.addf %89, %96 : vector<8x16x16xf32>
      %c1_i32_68 = arith.constant 1 : i32
      %98 = arith.muli %56, %c1_i32_68 : i32
      %c1_i32_69 = arith.constant 1 : i32
      %99 = arith.addi %98, %c1_i32_69 : i32
      %100 = arith.index_cast %99 : i32 to index
      %c2_70 = arith.constant 2 : index
      %c0_71 = arith.constant 0 : index
      %101 = vector.load %arg13[%100, %c2_70, %c0_71] : memref<18x18x16xf32, #tpu.memory_space<vmem>>, vector<8x16x16xf32>
      %102 = vector.shape_cast %14 : vector<16xf32> to vector<1x1x16xf32>
      %103 = vector.broadcast %102 : vector<1x1x16xf32> to vector<8x16x16xf32>
      %104 = arith.mulf %101, %103 : vector<8x16x16xf32>
      %105 = arith.addf %97, %104 : vector<8x16x16xf32>
      %c1_i32_72 = arith.constant 1 : i32
      %106 = arith.muli %56, %c1_i32_72 : i32
      %c2_i32_73 = arith.constant 2 : i32
      %107 = arith.addi %106, %c2_i32_73 : i32
      %108 = arith.index_cast %107 : i32 to index
      %c0_74 = arith.constant 0 : index
      %c0_75 = arith.constant 0 : index
      %109 = vector.load %arg13[%108, %c0_74, %c0_75] : memref<18x18x16xf32, #tpu.memory_space<vmem>>, vector<8x16x16xf32>
      %110 = vector.shape_cast %16 : vector<16xf32> to vector<1x1x16xf32>
      %111 = vector.broadcast %110 : vector<1x1x16xf32> to vector<8x16x16xf32>
      %112 = arith.mulf %109, %111 : vector<8x16x16xf32>
      %113 = arith.addf %105, %112 : vector<8x16x16xf32>
      %c1_i32_76 = arith.constant 1 : i32
      %114 = arith.muli %56, %c1_i32_76 : i32
      %c2_i32_77 = arith.constant 2 : i32
      %115 = arith.addi %114, %c2_i32_77 : i32
      %116 = arith.index_cast %115 : i32 to index
      %c1_78 = arith.constant 1 : index
      %c0_79 = arith.constant 0 : index
      %117 = vector.load %arg13[%116, %c1_78, %c0_79] : memref<18x18x16xf32, #tpu.memory_space<vmem>>, vector<8x16x16xf32>
      %118 = vector.shape_cast %18 : vector<16xf32> to vector<1x1x16xf32>
      %119 = vector.broadcast %118 : vector<1x1x16xf32> to vector<8x16x16xf32>
      %120 = arith.mulf %117, %119 : vector<8x16x16xf32>
      %121 = arith.addf %113, %120 : vector<8x16x16xf32>
      %c1_i32_80 = arith.constant 1 : i32
      %122 = arith.muli %56, %c1_i32_80 : i32
      %c2_i32_81 = arith.constant 2 : i32
      %123 = arith.addi %122, %c2_i32_81 : i32
      %124 = arith.index_cast %123 : i32 to index
      %c2_82 = arith.constant 2 : index
      %c0_83 = arith.constant 0 : index
      %125 = vector.load %arg13[%124, %c2_82, %c0_83] : memref<18x18x16xf32, #tpu.memory_space<vmem>>, vector<8x16x16xf32>
      %126 = vector.shape_cast %20 : vector<16xf32> to vector<1x1x16xf32>
      %127 = vector.broadcast %126 : vector<1x1x16xf32> to vector<8x16x16xf32>
      %128 = arith.mulf %125, %127 : vector<8x16x16xf32>
      %129 = arith.addf %121, %128 : vector<8x16x16xf32>
      %130 = vector.shape_cast %21 : vector<1x16xf32> to vector<1x1x16xf32>
      %131 = vector.broadcast %130 : vector<1x1x16xf32> to vector<8x16x16xf32>
      %132 = arith.addf %129, %131 : vector<8x16x16xf32>
      %cst_84 = arith.constant 3.000000e+00 : f32
      %133 = vector.broadcast %cst_84 : f32 to vector<8x16x16xf32>
      %134 = arith.addf %132, %133 : vector<8x16x16xf32>
      %cst_85 = arith.constant 0.000000e+00 : f32
      %cst_86 = arith.constant 6.000000e+00 : f32
      %135 = vector.broadcast %cst_85 : f32 to vector<8x16x16xf32>
      %136 = arith.maximumf %135, %134 : vector<8x16x16xf32>
      %137 = vector.broadcast %cst_86 : f32 to vector<8x16x16xf32>
      %138 = arith.minimumf %137, %136 : vector<8x16x16xf32>
      %139 = arith.mulf %132, %138 : vector<8x16x16xf32>
      %cst_87 = arith.constant 0.166666672 : f32
      %140 = vector.broadcast %cst_87 : f32 to vector<8x16x16xf32>
      %141 = arith.mulf %139, %140 : vector<8x16x16xf32>
      %142 = arith.index_cast %56 : i32 to index
      %c0_88 = arith.constant 0 : index
      %c0_89 = arith.constant 0 : index
      %143 = vector.load %arg14[%142, %c0_88, %c0_89] : memref<16x16x16xf32, #tpu.memory_space<vmem>>, vector<8x16x16xf32>
      tpu.vector_store %arg14[%142, %c0_88, %c0_89], %141 {strides = array<i32>} : memref<16x16x16xf32, #tpu.memory_space<vmem>>, vector<8x16x16xf32>,
      %cst_90 = arith.constant dense<0.000000e+00> : vector<16xf32>
      %144 = vector.multi_reduction <add>, %141, %cst_90 [0, 1] : vector<8x16x16xf32> to vector<16xf32>
      %145 = vector.shape_cast %144 : vector<16xf32> to vector<1x16xf32>
      %146 = arith.addf %arg16, %145 : vector<1x16xf32>
      scf.yield %146 : vector<1x16xf32>
    }
    %c2_i32_28 = arith.constant 2 : i32
    %cst_29 = arith.constant 3.906250e-03 : f32
    %34 = vector.broadcast %cst_29 : f32 to vector<1x16xf32>
    %35 = arith.mulf %33, %34 : vector<1x16xf32>
    %c0_30 = arith.constant 0 : index
    %c0_31 = arith.constant 0 : index
    %36 = vector.load %arg6[%c0_30, %c0_31] : memref<16x4xf32, #tpu.memory_space<vmem>>, vector<16x4xf32>
    %cst_32 = arith.constant dense<0.000000e+00> : vector<1x4xf32>
    %37 = tpu.matmul %35, %36, %cst_32 {dimension_numbers = #tpu.dot_dimension_numbers<[1], [0], [0], [1], [0, 0, 1, 1], [], []>} : vector<1x16xf32>, vector<16x4xf32>, vector<1x4xf32> -> vector<1x4xf32>
    %c0_33 = arith.constant 0 : index
    %c0_34 = arith.constant 0 : index
    %38 = vector.load %arg7[%c0_33, %c0_34] : memref<1x4xf32, #tpu.memory_space<vmem>>, vector<1x4xf32>
    %39 = arith.addf %37, %38 : vector<1x4xf32>
    %cst_35 = arith.constant 0.000000e+00 : f32
    %40 = vector.broadcast %cst_35 : f32 to vector<1x4xf32>
    %41 = arith.maximumf %39, %40 : vector<1x4xf32>
    %c0_36 = arith.constant 0 : index
    %c0_37 = arith.constant 0 : index
    %42 = vector.load %arg8[%c0_36, %c0_37] : memref<4x16xf32, #tpu.memory_space<vmem>>, vector<4x16xf32>
    %cst_38 = arith.constant dense<0.000000e+00> : vector<1x16xf32>
    %43 = tpu.matmul %41, %42, %cst_38 {dimension_numbers = #tpu.dot_dimension_numbers<[1], [0], [0], [1], [0, 0, 1, 1], [], []>} : vector<1x4xf32>, vector<4x16xf32>, vector<1x16xf32> -> vector<1x16xf32>
    %c0_39 = arith.constant 0 : index
    %c0_40 = arith.constant 0 : index
    %44 = vector.load %arg9[%c0_39, %c0_40] : memref<1x16xf32, #tpu.memory_space<vmem>>, vector<1x16xf32>
    %45 = arith.addf %43, %44 : vector<1x16xf32>
    %cst_41 = arith.constant 0.166666672 : f32
    %46 = vector.broadcast %cst_41 : f32 to vector<1x16xf32>
    %47 = arith.mulf %45, %46 : vector<1x16xf32>
    %cst_42 = arith.constant 5.000000e-01 : f32
    %48 = vector.broadcast %cst_42 : f32 to vector<1x16xf32>
    %49 = arith.addf %47, %48 : vector<1x16xf32>
    %cst_43 = arith.constant 0.000000e+00 : f32
    %cst_44 = arith.constant 1.000000e+00 : f32
    %50 = vector.broadcast %cst_43 : f32 to vector<1x16xf32>
    %51 = arith.maximumf %50, %49 : vector<1x16xf32>
    %52 = vector.broadcast %cst_44 : f32 to vector<1x16xf32>
    %53 = arith.minimumf %52, %51 : vector<1x16xf32>
    %c0_i32_45 = arith.constant 0 : i32
    %c2_i32_46 = arith.constant 2 : i32
    %54 = arith.addi %c0_i32_45, %c2_i32_46 : i32
    %c1_i32_47 = arith.constant 1 : i32
    scf.for %arg15 = %c0_i32_45 to %54 step %c1_i32_47  : i32 {
      %c8_i32 = arith.constant 8 : i32
      %55 = arith.muli %arg15, %c8_i32 : i32
      %56 = tpu.assume_multiple %55, 8 : i32
      %57 = arith.index_cast %56 : i32 to index
      %c0_49 = arith.constant 0 : index
      %c0_50 = arith.constant 0 : index
      %58 = vector.load %arg14[%57, %c0_49, %c0_50] : memref<16x16x16xf32, #tpu.memory_space<vmem>>, vector<8x16x16xf32>
      %59 = vector.shape_cast %53 : vector<1x16xf32> to vector<1x1x16xf32>
      %60 = vector.broadcast %59 : vector<1x1x16xf32> to vector<8x16x16xf32>
      %61 = arith.mulf %58, %60 : vector<8x16x16xf32>
      %62 = vector.shape_cast %61 : vector<8x16x16xf32> to vector<128x16xf32>
      %cst_51 = arith.constant dense<0.000000e+00> : vector<128x8xf32>
      %63 = tpu.matmul %62, %22, %cst_51 {dimension_numbers = #tpu.dot_dimension_numbers<[1], [0], [0], [1], [0, 0, 1, 1], [], []>} : vector<128x16xf32>, vector<16x8xf32>, vector<128x8xf32> -> vector<128x8xf32>
      %64 = vector.broadcast %23 : vector<1x8xf32> to vector<128x8xf32>
      %65 = arith.addf %63, %64 : vector<128x8xf32>
      %c0_52 = arith.constant 0 : index
      %66 = arith.index_cast %56 : i32 to index
      %c0_53 = arith.constant 0 : index
      %c0_54 = arith.constant 0 : index
      %67 = vector.load %arg1[%c0_52, %66, %c0_53, %c0_54] : memref<1x16x16x8xf32, #tpu.memory_space<vmem>>, vector<1x8x16x8xf32>
      %68 = vector.shape_cast %67 : vector<1x8x16x8xf32> to vector<8x16x8xf32>
      %69 = vector.shape_cast %68 : vector<8x16x8xf32> to vector<128x8xf32>
      %70 = arith.addf %65, %69 : vector<128x8xf32>
      %71 = vector.shape_cast %70 : vector<128x8xf32> to vector<8x16x8xf32>
      %c0_55 = arith.constant 0 : index
      %72 = arith.index_cast %56 : i32 to index
      %c0_56 = arith.constant 0 : index
      %c0_57 = arith.constant 0 : index
      %73 = vector.load %arg12[%c0_55, %72, %c0_56, %c0_57] : memref<1x16x16x8xf32, #tpu.memory_space<vmem>>, vector<1x8x16x8xf32>
      %74 = vector.shape_cast %73 : vector<1x8x16x8xf32> to vector<8x16x8xf32>
      %75 = vector.shape_cast %71 : vector<8x16x8xf32> to vector<1x8x16x8xf32>
      tpu.vector_store %arg12[%c0_55, %72, %c0_56, %c0_57], %75 {strides = array<i32>} : memref<1x16x16x8xf32, #tpu.memory_space<vmem>>, vector<1x8x16x8xf32>,
    }
    %c2_i32_48 = arith.constant 2 : i32
    return
  }
  func.func @transform_0(%arg0: i32) -> (i32, i32, i32, i32) {
    %c0_i32 = arith.constant 0 : i32
    %c0_i32_0 = arith.constant 0 : i32
    %c0_i32_1 = arith.constant 0 : i32
    %c0_i32_2 = arith.constant 0 : i32
    return %arg0, %c0_i32, %c0_i32_0, %c0_i32_1 : i32, i32, i32, i32
  }
  func.func @transform_1(%arg0: i32) -> (i32, i32) {
    %c0_i32 = arith.constant 0 : i32
    %c0_i32_0 = arith.constant 0 : i32
    %c0_i32_1 = arith.constant 0 : i32
    return %c0_i32, %c0_i32_0 : i32, i32
  }
  func.func @transform_2(%arg0: i32) -> (i32, i32) {
    %c0_i32 = arith.constant 0 : i32
    %c0_i32_0 = arith.constant 0 : i32
    %c0_i32_1 = arith.constant 0 : i32
    return %c0_i32, %c0_i32_0 : i32, i32
  }
  func.func @transform_3(%arg0: i32) -> (i32, i32) {
    %c0_i32 = arith.constant 0 : i32
    %c0_i32_0 = arith.constant 0 : i32
    %c0_i32_1 = arith.constant 0 : i32
    return %c0_i32, %c0_i32_0 : i32, i32
  }
  func.func @transform_4(%arg0: i32) -> (i32, i32) {
    %c0_i32 = arith.constant 0 : i32
    %c0_i32_0 = arith.constant 0 : i32
    %c0_i32_1 = arith.constant 0 : i32
    return %c0_i32, %c0_i32_0 : i32, i32
  }
  func.func @transform_5(%arg0: i32) -> (i32, i32) {
    %c0_i32 = arith.constant 0 : i32
    %c0_i32_0 = arith.constant 0 : i32
    %c0_i32_1 = arith.constant 0 : i32
    return %c0_i32, %c0_i32_0 : i32, i32
  }
  func.func @transform_6(%arg0: i32) -> (i32, i32) {
    %c0_i32 = arith.constant 0 : i32
    %c0_i32_0 = arith.constant 0 : i32
    %c0_i32_1 = arith.constant 0 : i32
    return %c0_i32, %c0_i32_0 : i32, i32
  }
  func.func @transform_7(%arg0: i32) -> (i32, i32) {
    %c0_i32 = arith.constant 0 : i32
    %c0_i32_0 = arith.constant 0 : i32
    %c0_i32_1 = arith.constant 0 : i32
    return %c0_i32, %c0_i32_0 : i32, i32
  }
  func.func @transform_8(%arg0: i32) -> (i32, i32) {
    %c0_i32 = arith.constant 0 : i32
    %c0_i32_0 = arith.constant 0 : i32
    %c0_i32_1 = arith.constant 0 : i32
    return %c0_i32, %c0_i32_0 : i32, i32
  }
  func.func @transform_9(%arg0: i32) -> (i32, i32) {
    %c0_i32 = arith.constant 0 : i32
    %c0_i32_0 = arith.constant 0 : i32
    %c0_i32_1 = arith.constant 0 : i32
    return %c0_i32, %c0_i32_0 : i32, i32
  }
  func.func @transform_10(%arg0: i32) -> (i32, i32) {
    %c0_i32 = arith.constant 0 : i32
    %c0_i32_0 = arith.constant 0 : i32
    %c0_i32_1 = arith.constant 0 : i32
    return %c0_i32, %c0_i32_0 : i32, i32
  }
  func.func @transform_11(%arg0: i32) -> (i32, i32, i32, i32) {
    %c0_i32 = arith.constant 0 : i32
    %c0_i32_0 = arith.constant 0 : i32
    %c0_i32_1 = arith.constant 0 : i32
    %c0_i32_2 = arith.constant 0 : i32
    return %arg0, %c0_i32, %c0_i32_0, %c0_i32_1 : i32, i32, i32, i32
  }
}

</mosaic_0001>

<llo_original>
// kernel: tpu_custom_call.1
$region0: #{tpu_custom_call.1}
  #allocation0 [shape = 'u32[]', space=smem, size = 0x4, offset = 0x4, fixed_abs, tag = 'smem constant byte address 0x4 - core index']
  #allocation1 [shape = 'u32[72,128]{1,0:T(1,128)}', space=vmem, size = 0x9000, scoped, tag = 'internal scratch']
  #allocation2 [shape = 'f32[18,18,16]{2,1,0:T(8,128)}', space=vmem, size = 0x36000, scoped, tag = 'scratch operand']
  #allocation3 [shape = 'f32[16,16,16]{2,1,0:T(8,128)}', space=vmem, size = 0x20000, scoped, tag = 'scratch operand']
  %s0 = inlined_call_operand.vmem [shape: f32[2,16,16,8], index: 0, kind: input, shape index: {}]
  %s1 = inlined_call_operand.vmem [shape: f32[8,16], index: 1, kind: input, shape index: {}]
  %s2 = inlined_call_operand.vmem [shape: f32[1,16], index: 2, kind: input, shape index: {}]
  %s3 = inlined_call_operand.vmem [shape: f32[9,16], index: 3, kind: input, shape index: {}]
  %s4 = inlined_call_operand.vmem [shape: f32[1,16], index: 4, kind: input, shape index: {}]
  %s5 = inlined_call_operand.vmem [shape: f32[16,4], index: 5, kind: input, shape index: {}]
  %s6 = inlined_call_operand.vmem [shape: f32[1,4], index: 6, kind: input, shape index: {}]
  %s7 = inlined_call_operand.vmem [shape: f32[4,16], index: 7, kind: input, shape index: {}]
  %s8 = inlined_call_operand.vmem [shape: f32[1,16], index: 8, kind: input, shape index: {}]
  %s9 = inlined_call_operand.vmem [shape: f32[16,8], index: 9, kind: input, shape index: {}]
  %s10 = inlined_call_operand.vmem [shape: f32[1,8], index: 10, kind: input, shape index: {}]
  %s11 = inlined_call_operand.vmem [shape: f32[2,16,16,8], index: 11, kind: output, shape index: {}]
  %s12 = sld [smem:[#allocation0]]
  $region98: #{tpu_custom_call.1} parent=0
    _
  %s14 = ssub.s32 1, %s12
  %s15 = scalar_select 0, %s14, %s12
  loop: start=0, step=1, limit=4
  $region2: #{tpu_custom_call.1} parent=0 // loop_pre_header
    _
  $region3: #{tpu_custom_call.1} parent=0 // loop_header
    %s17 = sphi 0, %s21
    %p18 = scmp.ge.s32.totalorder %s17, 4
    %s27 = sphi 0, %s29
    %s30 = sphi 0, %s27
    %s31 = sphi 0, %s30
    %s47 = sphi 0, %s31
    %s51 = sphi 0, %s51
    %s53 = sphi 0, %s51
    %s54 = sphi 0, %s53
    %s68 = sphi 0, %s54
    %s72 = sphi 0, %s72
    %s74 = sphi 0, %s72
    %s75 = sphi 0, %s74
    %s89 = sphi 0, %s75
    %s93 = sphi 0, %s93
    %s95 = sphi 0, %s93
    %s96 = sphi 0, %s95
    %s110 = sphi 0, %s96
    %s114 = sphi 0, %s114
    %s116 = sphi 0, %s114
    %s117 = sphi 0, %s116
    %s131 = sphi 0, %s117
    %s135 = sphi 0, %s135
    %s137 = sphi 0, %s135
    %s138 = sphi 0, %s137
    %s152 = sphi 0, %s138
    %s156 = sphi 0, %s156
    %s158 = sphi 0, %s156
    %s159 = sphi 0, %s158
    %s173 = sphi 0, %s159
    %s177 = sphi 0, %s177
    %s179 = sphi 0, %s177
    %s180 = sphi 0, %s179
    %s194 = sphi 0, %s180
    %s198 = sphi 0, %s198
    %s200 = sphi 0, %s198
    %s201 = sphi 0, %s200
    %s215 = sphi 0, %s201
    %s219 = sphi 0, %s219
    %s221 = sphi 0, %s219
    %s222 = sphi 0, %s221
    %s236 = sphi 0, %s222
    %s240 = sphi 0, %s240
    %s242 = sphi 0, %s240
    %s243 = sphi 0, %s242
    %s257 = sphi 0, %s243
    %s263 = sphi 0, %s265
    %s266 = sphi 0, %s263
    %s267 = sphi 0, %s266
    %s283 = sphi 0, %s267
  $region4: #{tpu_custom_call.1} parent=0 // loop_header_branch
    %20 = sbr.rel (%p18) target = $region8
  $region5: #{tpu_custom_call.1} parent=0 // loop_body
    %s22 = ssub.s32 %s17, 1
    %s23 = ssub.s32 %s17, 2
    %s24 = sadd.s32 %s17, 1
    %s25 = ssub.s32 %s17, %s24
    %p26 = scmp.eq.s32.totalorder %s25, 0
    %s28 = sadd.s32 %s27, 1
    %s29 = scalar_select %p26, %s27, %s28
    %p32 = pneg %p26
    %p33 = scmp.eq.s32.totalorder %s17, 1
    %p34 = por %p32, %p33
    %p35 = scmp.ne.s32.totalorder %s27, %s30
    %p36 = scmp.eq.s32.totalorder %s17, 0
    %p37 = por %p35, %p36
    %p38 = scmp.ne.s32.totalorder %s27, %s30
    %p39 = scmp.eq.s32.totalorder %s22, 1
    %p40 = por %p38, %p39
    %p41 = scmp.ne.s32.totalorder %s30, %s31
    %p42 = scmp.eq.s32.totalorder %s22, 0
    %p43 = por %p41, %p42
    %p44 = scmp.ne.s32.totalorder %s30, %s31
    %p45 = scmp.eq.s32.totalorder %s23, 1
    %p46 = por %p44, %p45
    %p48 = scmp.ne.s32.totalorder %s31, %s47
    %p49 = scmp.eq.s32.totalorder %s23, 0
    %p50 = por %p48, %p49
    %s52 = sadd.s32 %s51, 1
    %p55 = scmp.eq.s32.totalorder %s17, 1
    %p56 = scmp.ne.s32.totalorder %s51, %s53
    %p57 = scmp.eq.s32.totalorder %s17, 0
    %p58 = por %p56, %p57
    %p59 = scmp.ne.s32.totalorder %s51, %s53
    %p60 = scmp.eq.s32.totalorder %s22, 1
    %p61 = por %p59, %p60
    %p62 = scmp.ne.s32.totalorder %s53, %s54
    %p63 = scmp.eq.s32.totalorder %s22, 0
    %p64 = por %p62, %p63
    %p65 = scmp.ne.s32.totalorder %s53, %s54
    %p66 = scmp.eq.s32.totalorder %s23, 1
    %p67 = por %p65, %p66
    %p69 = scmp.ne.s32.totalorder %s54, %s68
    %p70 = scmp.eq.s32.totalorder %s23, 0
    %p71 = por %p69, %p70
    %s73 = sadd.s32 %s72, 1
    %p76 = scmp.eq.s32.totalorder %s17, 1
    %p77 = scmp.ne.s32.totalorder %s72, %s74
    %p78 = scmp.eq.s32.totalorder %s17, 0
    %p79 = por %p77, %p78
    %p80 = scmp.ne.s32.totalorder %s72, %s74
    %p81 = scmp.eq.s32.totalorder %s22, 1
    %p82 = por %p80, %p81
    %p83 = scmp.ne.s32.totalorder %s74, %s75
    %p84 = scmp.eq.s32.totalorder %s22, 0
    %p85 = por %p83, %p84
    %p86 = scmp.ne.s32.totalorder %s74, %s75
    %p87 = scmp.eq.s32.totalorder %s23, 1
    %p88 = por %p86, %p87
    %p90 = scmp.ne.s32.totalorder %s75, %s89
    %p91 = scmp.eq.s32.totalorder %s23, 0
    %p92 = por %p90, %p91
    %s94 = sadd.s32 %s93, 1
    %p97 = scmp.eq.s32.totalorder %s17, 1
    %p98 = scmp.ne.s32.totalorder %s93, %s95
    %p99 = scmp.eq.s32.totalorder %s17, 0
    %p100 = por %p98, %p99
    %p101 = scmp.ne.s32.totalorder %s93, %s95
    %p102 = scmp.eq.s32.totalorder %s22, 1
    %p103 = por %p101, %p102
    %p104 = scmp.ne.s32.totalorder %s95, %s96
    %p105 = scmp.eq.s32.totalorder %s22, 0
    %p106 = por %p104, %p105
    %p107 = scmp.ne.s32.totalorder %s95, %s96
    %p108 = scmp.eq.s32.totalorder %s23, 1
    %p109 = por %p107, %p108
    %p111 = scmp.ne.s32.totalorder %s96, %s110
    %p112 = scmp.eq.s32.totalorder %s23, 0
    %p113 = por %p111, %p112
    %s115 = sadd.s32 %s114, 1
    %p118 = scmp.eq.s32.totalorder %s17, 1
    %p119 = scmp.ne.s32.totalorder %s114, %s116
    %p120 = scmp.eq.s32.totalorder %s17, 0
    %p121 = por %p119, %p120
    %p122 = scmp.ne.s32.totalorder %s114, %s116
    %p123 = scmp.eq.s32.totalorder %s22, 1
    %p124 = por %p122, %p123
    %p125 = scmp.ne.s32.totalorder %s116, %s117
    %p126 = scmp.eq.s32.totalorder %s22, 0
    %p127 = por %p125, %p126
    %p128 = scmp.ne.s32.totalorder %s116, %s117
    %p129 = scmp.eq.s32.totalorder %s23, 1
    %p130 = por %p128, %p129
    %p132 = scmp.ne.s32.totalorder %s117, %s131
    %p133 = scmp.eq.s32.totalorder %s23, 0
    %p134 = por %p132, %p133
    %s136 = sadd.s32 %s135, 1
    %p139 = scmp.eq.s32.totalorder %s17, 1
    %p140 = scmp.ne.s32.totalorder %s135, %s137
    %p141 = scmp.eq.s32.totalorder %s17, 0
    %p142 = por %p140, %p141
    %p143 = scmp.ne.s32.totalorder %s135, %s137
    %p144 = scmp.eq.s32.totalorder %s22, 1
    %p145 = por %p143, %p144
    %p146 = scmp.ne.s32.totalorder %s137, %s138
    %p147 = scmp.eq.s32.totalorder %s22, 0
    %p148 = por %p146, %p147
    %p149 = scmp.ne.s32.totalorder %s137, %s138
    %p150 = scmp.eq.s32.totalorder %s23, 1
    %p151 = por %p149, %p150
    %p153 = scmp.ne.s32.totalorder %s138, %s152
    %p154 = scmp.eq.s32.totalorder %s23, 0
    %p155 = por %p153, %p154
    %s157 = sadd.s32 %s156, 1
    %p160 = scmp.eq.s32.totalorder %s17, 1
    %p161 = scmp.ne.s32.totalorder %s156, %s158
    %p162 = scmp.eq.s32.totalorder %s17, 0
    %p163 = por %p161, %p162
    %p164 = scmp.ne.s32.totalorder %s156, %s158
    %p165 = scmp.eq.s32.totalorder %s22, 1
    %p166 = por %p164, %p165
    %p167 = scmp.ne.s32.totalorder %s158, %s159
    %p168 = scmp.eq.s32.totalorder %s22, 0
    %p169 = por %p167, %p168
    %p170 = scmp.ne.s32.totalorder %s158, %s159
    %p171 = scmp.eq.s32.totalorder %s23, 1
    %p172 = por %p170, %p171
    %p174 = scmp.ne.s32.totalorder %s159, %s173
    %p175 = scmp.eq.s32.totalorder %s23, 0
    %p176 = por %p174, %p175
    %s178 = sadd.s32 %s177, 1
    %p181 = scmp.eq.s32.totalorder %s17, 1
    %p182 = scmp.ne.s32.totalorder %s177, %s179
    %p183 = scmp.eq.s32.totalorder %s17, 0
    %p184 = por %p182, %p183
    %p185 = scmp.ne.s32.totalorder %s177, %s179
    %p186 = scmp.eq.s32.totalorder %s22, 1
    %p187 = por %p185, %p186
    %p188 = scmp.ne.s32.totalorder %s179, %s180
    %p189 = scmp.eq.s32.totalorder %s22, 0
    %p190 = por %p188, %p189
    %p191 = scmp.ne.s32.totalorder %s179, %s180
    %p192 = scmp.eq.s32.totalorder %s23, 1
    %p193 = por %p191, %p192
    %p195 = scmp.ne.s32.totalorder %s180, %s194
    %p196 = scmp.eq.s32.totalorder %s23, 0
    %p197 = por %p195, %p196
    %s199 = sadd.s32 %s198, 1
    %p202 = scmp.eq.s32.totalorder %s17, 1
    %p203 = scmp.ne.s32.totalorder %s198, %s200
    %p204 = scmp.eq.s32.totalorder %s17, 0
    %p205 = por %p203, %p204
    %p206 = scmp.ne.s32.totalorder %s198, %s200
    %p207 = scmp.eq.s32.totalorder %s22, 1
    %p208 = por %p206, %p207
    %p209 = scmp.ne.s32.totalorder %s200, %s201
    %p210 = scmp.eq.s32.totalorder %s22, 0
    %p211 = por %p209, %p210
    %p212 = scmp.ne.s32.totalorder %s200, %s201
    %p213 = scmp.eq.s32.totalorder %s23, 1
    %p214 = por %p212, %p213
    %p216 = scmp.ne.s32.totalorder %s201, %s215
    %p217 = scmp.eq.s32.totalorder %s23, 0
    %p218 = por %p216, %p217
    %s220 = sadd.s32 %s219, 1
    %p223 = scmp.eq.s32.totalorder %s17, 1
    %p224 = scmp.ne.s32.totalorder %s219, %s221
    %p225 = scmp.eq.s32.totalorder %s17, 0
    %p226 = por %p224, %p225
    %p227 = scmp.ne.s32.totalorder %s219, %s221
    %p228 = scmp.eq.s32.totalorder %s22, 1
    %p229 = por %p227, %p228
    %p230 = scmp.ne.s32.totalorder %s221, %s222
    %p231 = scmp.eq.s32.totalorder %s22, 0
    %p232 = por %p230, %p231
    %p233 = scmp.ne.s32.totalorder %s221, %s222
    %p234 = scmp.eq.s32.totalorder %s23, 1
    %p235 = por %p233, %p234
    %p237 = scmp.ne.s32.totalorder %s222, %s236
    %p238 = scmp.eq.s32.totalorder %s23, 0
    %p239 = por %p237, %p238
    %s241 = sadd.s32 %s240, 1
    %p244 = scmp.eq.s32.totalorder %s17, 1
    %p245 = scmp.ne.s32.totalorder %s240, %s242
    %p246 = scmp.eq.s32.totalorder %s17, 0
    %p247 = por %p245, %p246
    %p248 = scmp.ne.s32.totalorder %s240, %s242
    %p249 = scmp.eq.s32.totalorder %s22, 1
    %p250 = por %p248, %p249
    %p251 = scmp.ne.s32.totalorder %s242, %s243
    %p252 = scmp.eq.s32.totalorder %s22, 0
    %p253 = por %p251, %p252
    %p254 = scmp.ne.s32.totalorder %s242, %s243
    %p255 = scmp.eq.s32.totalorder %s23, 1
    %p256 = por %p254, %p255
    %p258 = scmp.ne.s32.totalorder %s243, %s257
    %p259 = scmp.eq.s32.totalorder %s23, 0
    %p260 = por %p258, %p259
    %s261 = ssub.s32 %s17, %s24
    %p262 = scmp.eq.s32.totalorder %s261, 0
    %s264 = sadd.s32 %s263, 1
    %s265 = scalar_select %p262, %s263, %s264
    %p268 = pneg %p262
    %p269 = scmp.eq.s32.totalorder %s17, 1
    %p270 = por %p268, %p269
    %p271 = scmp.ne.s32.totalorder %s263, %s266
    %p272 = scmp.eq.s32.totalorder %s17, 0
    %p273 = por %p271, %p272
    %p274 = scmp.ne.s32.totalorder %s263, %s266
    %p275 = scmp.eq.s32.totalorder %s22, 1
    %p276 = por %p274, %p275
    %p277 = scmp.ne.s32.totalorder %s266, %s267
    %p278 = scmp.eq.s32.totalorder %s22, 0
    %p279 = por %p277, %p278
    %p280 = scmp.ne.s32.totalorder %s266, %s267
    %p281 = scmp.eq.s32.totalorder %s23, 1
    %p282 = por %p280, %p281
    %p284 = scmp.ne.s32.totalorder %s267, %s283
    %p285 = scmp.eq.s32.totalorder %s23, 0
    %p286 = por %p284, %p285
    %p287 = scmp.le.s32.totalorder 1, %s17
    %p288 = scmp.lt.s32.totalorder %s17, 3
    %p289 = pnand %p287, %p288
    %p290 = pneg %p289
    // Predicated region
    $region9: #{tpu_custom_call.1} parent=5 // pred_check
      _
    $region10: #{tpu_custom_call.1} parent=5 // pred_check_branch
      %292 = sbr.rel (%p289) target = $region12
    $region11: #{tpu_custom_call.1} parent=5 // pred_region
      %s293 = ssub.s32 %s17, 1
      // Predicated region
      $region13: #{tpu_custom_call.1} parent=11 // pred_check
        %p294 = pneg %p64
      $region14: #{tpu_custom_call.1} parent=11 // pred_check_branch
        %296 = sbr.rel (%p294) target = $region16
      $region15: #{tpu_custom_call.1} parent=11 // pred_region
        _
      $region16: #{tpu_custom_call.1} parent=11 // pred_fallthru
        _
      // Predicated region
      $region17: #{tpu_custom_call.1} parent=11 // pred_check
        %p297 = pneg %p85
      $region18: #{tpu_custom_call.1} parent=11 // pred_check_branch
        %299 = sbr.rel (%p297) target = $region20
      $region19: #{tpu_custom_call.1} parent=11 // pred_region
        _
      $region20: #{tpu_custom_call.1} parent=11 // pred_fallthru
        _
      // Predicated region
      $region21: #{tpu_custom_call.1} parent=11 // pred_check
        %p300 = pneg %p106
      $region22: #{tpu_custom_call.1} parent=11 // pred_check_branch
        %302 = sbr.rel (%p300) target = $region24
      $region23: #{tpu_custom_call.1} parent=11 // pred_region
        _
      $region24: #{tpu_custom_call.1} parent=11 // pred_fallthru
        _
      // Predicated region
      $region25: #{tpu_custom_call.1} parent=11 // pred_check
        %p303 = pneg %p127
      $region26: #{tpu_custom_call.1} parent=11 // pred_check_branch
        %305 = sbr.rel (%p303) target = $region28
      $region27: #{tpu_custom_call.1} parent=11 // pred_region
        _
      $region28: #{tpu_custom_call.1} parent=11 // pred_fallthru
        _
      // Predicated region
      $region29: #{tpu_custom_call.1} parent=11 // pred_check
        %p306 = pneg %p148
      $region30: #{tpu_custom_call.1} parent=11 // pred_check_branch
        %308 = sbr.rel (%p306) target = $region32
      $region31: #{tpu_custom_call.1} parent=11 // pred_region
        _
      $region32: #{tpu_custom_call.1} parent=11 // pred_fallthru
        _
      // Predicated region
      $region33: #{tpu_custom_call.1} parent=11 // pred_check
        %p309 = pneg %p169
      $region34: #{tpu_custom_call.1} parent=11 // pred_check_branch
        %311 = sbr.rel (%p309) target = $region36
      $region35: #{tpu_custom_call.1} parent=11 // pred_region
        _
      $region36: #{tpu_custom_call.1} parent=11 // pred_fallthru
        _
      // Predicated region
      $region37: #{tpu_custom_call.1} parent=11 // pred_check
        %p312 = pneg %p190
      $region38: #{tpu_custom_call.1} parent=11 // pred_check_branch
        %314 = sbr.rel (%p312) target = $region40
      $region39: #{tpu_custom_call.1} parent=11 // pred_region
        _
      $region40: #{tpu_custom_call.1} parent=11 // pred_fallthru
        _
      // Predicated region
      $region41: #{tpu_custom_call.1} parent=11 // pred_check
        %p315 = pneg %p211
      $region42: #{tpu_custom_call.1} parent=11 // pred_check_branch
        %317 = sbr.rel (%p315) target = $region44
      $region43: #{tpu_custom_call.1} parent=11 // pred_region
        _
      $region44: #{tpu_custom_call.1} parent=11 // pred_fallthru
        _
      // Predicated region
      $region45: #{tpu_custom_call.1} parent=11 // pred_check
        %p318 = pneg %p232
      $region46: #{tpu_custom_call.1} parent=11 // pred_check_branch
        %320 = sbr.rel (%p318) target = $region48
      $region47: #{tpu_custom_call.1} parent=11 // pred_region
        _
      $region48: #{tpu_custom_call.1} parent=11 // pred_fallthru
        _
      // Predicated region
      $region49: #{tpu_custom_call.1} parent=11 // pred_check
        %p321 = pneg %p253
      $region50: #{tpu_custom_call.1} parent=11 // pred_check_branch
        %323 = sbr.rel (%p321) target = $region52
      $region51: #{tpu_custom_call.1} parent=11 // pred_region
        _
      $region52: #{tpu_custom_call.1} parent=11 // pred_fallthru
        _
    $region12: #{tpu_custom_call.1} parent=5 // pred_fallthru
      _
    %p324 = scmp.lt.s32.totalorder %s17, 2
    // Predicated region
    $region53: #{tpu_custom_call.1} parent=5 // pred_check
      %p325 = pneg %p324
    $region54: #{tpu_custom_call.1} parent=5 // pred_check_branch
      %327 = sbr.rel (%p325) target = $region56
    $region55: #{tpu_custom_call.1} parent=5 // pred_region
      // Predicated region
      $region57: #{tpu_custom_call.1} parent=55 // pred_check
        %p328 = pneg %p37
      $region58: #{tpu_custom_call.1} parent=55 // pred_check_branch
        %330 = sbr.rel (%p328) target = $region60
      $region59: #{tpu_custom_call.1} parent=55 // pred_region
        %p331 = scmp.lt.s32.totalorder %s17, 1
        %s332 = scalar_select %p331, %s17, 1
        %s333 = smul.addr %s332, 32
        %s334 = smul.addr %s333, 8
        %s335 = scalar_lea.vmem %s0, %s334
      $region60: #{tpu_custom_call.1} parent=55 // pred_fallthru
        _
    $region56: #{tpu_custom_call.1} parent=5 // pred_fallthru
      _
    %p336 = scmp.le.s32.totalorder 1, %s17
    %p337 = scmp.lt.s32.totalorder %s17, 3
    %p338 = pnand %p336, %p337
    %p339 = pneg %p338
    // Predicated region
    $region61: #{tpu_custom_call.1} parent=5 // pred_check
      _
    $region62: #{tpu_custom_call.1} parent=5 // pred_check_branch
      %341 = sbr.rel (%p338) target = $region64
    $region63: #{tpu_custom_call.1} parent=5 // pred_region
      %s342 = ssub.s32 %s17, 1
      %p343 = scmp.lt.s32.totalorder %s22, 1
      %s344 = scalar_select %p343, %s22, 1
      %s345 = smul.addr %s344, 32
      %s346 = smul.addr %s345, 8
      %s347 = scalar_lea.vmem %s0, %s346
      %p348 = pneg %p43
      %p349 = pneg %p40
      %p350 = pneg %p64
      %p351 = pneg %p61
      %p352 = pneg %p85
      %p353 = pneg %p82
      %p354 = pneg %p106
      %p355 = pneg %p103
      %p356 = pneg %p127
      %p357 = pneg %p124
      %p358 = pneg %p148
      %p359 = pneg %p145
      %p360 = pneg %p169
      %p361 = pneg %p166
      %p362 = pneg %p190
      %p363 = pneg %p187
      %p364 = pneg %p211
      %p365 = pneg %p208
      %p366 = pneg %p232
      %p367 = pneg %p229
      %p368 = pneg %p253
      %p369 = pneg %p250
      %p370 = pneg %p279
      %p371 = pneg %p276
      %p372 = scmp.lt.s32.totalorder %s22, 1
      %s373 = scalar_select %p372, %s22, 1
      %s374 = smul.addr %s373, 32
      %s375 = smul.addr %s374, 8
      %s376 = scalar_lea.vmem %s11, %s375
      %p377 = scmp.lt.s32.totalorder %s22, 1
      %s378 = scalar_select %p377, %s22, 1
      %s379 = smul.addr %s378, 32
      %s380 = smul.addr %s379, 8
      %s381 = scalar_lea.vmem %s0, %s380
      %p382 = scmp.lt.s32.totalorder %s22, 1
      %s383 = scalar_select %p382, %s22, 1
      %s384 = smul.addr %s383, 32
      %s385 = smul.addr %s384, 8
      %s386 = scalar_lea.vmem %s11, %s385
      %v387 = vld [vmem:[%s1] sm:$0xff]
      %v388 = vld [vmem:[%s2] sm:$0x1]
      %v389 = vld [vmem:[%s3] sm:$0xff]
      %v390 = vld [vmem:[%s3 + $0x8] sm:$0x1]
      %v391 = vld [vmem:[%s4] sm:$0x1]
      %v392 = vld [vmem:[%s9] sm:$0xff]
      %v393 = vld [vmem:[%s9 + $0x8] sm:$0xff]
      %v394 = vld [vmem:[%s10] sm:$0x1]
      %vm395 = vcmask 130048
      %396 = vst.msk [vmem:[#allocation2] sm:$0xff] %vm395, 0.0
      %397 = vst.msk [vmem:[#allocation2 + $0x8] sm:$0xff] %vm395, 0.0
      %vm398 = vcmask 123904
      %399 = vst.msk [vmem:[#allocation2 + $0x10] sm:$0x3] %vm398, 0.0
      %s400 = scalar_lea.vmem [#allocation2], 408
      %401 = vst.msk [vmem:[%s400] sm:$0xff] %vm395, 0.0
      %402 = vst.msk [vmem:[%s400 + $0x8] sm:$0xff] %vm395, 0.0
      %403 = vst.msk [vmem:[%s400 + $0x10] sm:$0x3] %vm398, 0.0
      %vm404 = vcmask 122880
      %405 = vst.msk [vmem:[#allocation2] sm:$0x1] %vm404, 0.0
      %406 = vst.msk [vmem:[#allocation2 + $0x18] sm:$0x1] %vm404, 0.0
      %407 = vst.msk [vmem:[#allocation2 + $0x30] sm:$0x1] %vm404, 0.0
      %408 = vst.msk [vmem:[#allocation2 + $0x48] sm:$0x1] %vm404, 0.0
      %409 = vst.msk [vmem:[#allocation2 + $0x60] sm:$0x1] %vm404, 0.0
      %410 = vst.msk [vmem:[#allocation2 + $0x78] sm:$0x1] %vm404, 0.0
      %411 = vst.msk [vmem:[#allocation2 + $0x90] sm:$0x1] %vm404, 0.0
      %412 = vst.msk [vmem:[#allocation2 + $0xa8] sm:$0x1] %vm404, 0.0
      %413 = vst.msk [vmem:[#allocation2 + $0xc0] sm:$0x1] %vm404, 0.0
      %414 = vst.msk [vmem:[#allocation2 + $0xd8] sm:$0x1] %vm404, 0.0
      %415 = vst.msk [vmem:[#allocation2 + $0xf0] sm:$0x1] %vm404, 0.0
      %416 = vst.msk [vmem:[#allocation2 + $0x108] sm:$0x1] %vm404, 0.0
      %417 = vst.msk [vmem:[#allocation2 + $0x120] sm:$0x1] %vm404, 0.0
      %418 = vst.msk [vmem:[#allocation2 + $0x138] sm:$0x1] %vm404, 0.0
      %419 = vst.msk [vmem:[#allocation2 + $0x150] sm:$0x1] %vm404, 0.0
      %420 = vst.msk [vmem:[#allocation2 + $0x168] sm:$0x1] %vm404, 0.0
      %421 = vst.msk [vmem:[#allocation2 + $0x180] sm:$0x1] %vm404, 0.0
      %422 = vst.msk [vmem:[#allocation2 + $0x198] sm:$0x1] %vm404, 0.0
      %423 = vst.msk [vmem:[#allocation2 + $0x11] sm:$0x1] %vm404, 0.0
      %424 = vst.msk [vmem:[#allocation2 + $0x29] sm:$0x1] %vm404, 0.0
      %425 = vst.msk [vmem:[#allocation2 + $0x41] sm:$0x1] %vm404, 0.0
      %426 = vst.msk [vmem:[#allocation2 + $0x59] sm:$0x1] %vm404, 0.0
      %427 = vst.msk [vmem:[#allocation2 + $0x71] sm:$0x1] %vm404, 0.0
      %428 = vst.msk [vmem:[#allocation2 + $0x89] sm:$0x1] %vm404, 0.0
      %429 = vst.msk [vmem:[#allocation2 + $0xa1] sm:$0x1] %vm404, 0.0
      %430 = vst.msk [vmem:[#allocation2 + $0xb9] sm:$0x1] %vm404, 0.0
      %431 = vst.msk [vmem:[#allocation2 + $0xd1] sm:$0x1] %vm404, 0.0
      %432 = vst.msk [vmem:[#allocation2 + $0xe9] sm:$0x1] %vm404, 0.0
      %433 = vst.msk [vmem:[#allocation2 + $0x101] sm:$0x1] %vm404, 0.0
      %434 = vst.msk [vmem:[#allocation2 + $0x119] sm:$0x1] %vm404, 0.0
      %435 = vst.msk [vmem:[#allocation2 + $0x131] sm:$0x1] %vm404, 0.0
      %436 = vst.msk [vmem:[#allocation2 + $0x149] sm:$0x1] %vm404, 0.0
      %437 = vst.msk [vmem:[#allocation2 + $0x161] sm:$0x1] %vm404, 0.0
      %438 = vst.msk [vmem:[#allocation2 + $0x179] sm:$0x1] %vm404, 0.0
      %439 = vst.msk [vmem:[#allocation2 + $0x191] sm:$0x1] %vm404, 0.0
      %440 = vst.msk [vmem:[#allocation2 + $0x1a9] sm:$0x1] %vm404, 0.0
      loop: start=0, step=1, limit=2
      $region65: #{tpu_custom_call.1} parent=63 // loop_pre_header
        _
      $region66: #{tpu_custom_call.1} parent=63 // loop_header
        %s442 = sphi 0, %s446
        %p443 = scmp.ge.s32.totalorder %s442, 2
      $region67: #{tpu_custom_call.1} parent=63 // loop_header_branch
        %445 = sbr.rel (%p443) target = $region71
      $region68: #{tpu_custom_call.1} parent=63 // loop_body
        %s447 = smul.u32 %s442, 8
        %s448 = smul.u32 %s447, 16
        %s449 = scalar_lea.vmem %s381, %s448
        %v450 = vld [vmem:[%s449] sm:$0xff]
        %v451 = vld [vmem:[%s449 + $0x8] sm:$0xff]
        %v452 = vld [vmem:[%s449 + $0x10] sm:$0xff]
        %v453 = vld [vmem:[%s449 + $0x18] sm:$0xff]
        %v454 = vld [vmem:[%s449 + $0x20] sm:$0xff]
        %v455 = vld [vmem:[%s449 + $0x28] sm:$0xff]
        %v456 = vld [vmem:[%s449 + $0x30] sm:$0xff]
        %v457 = vld [vmem:[%s449 + $0x38] sm:$0xff]
        %v458 = vld [vmem:[%s449 + $0x40] sm:$0xff]
        %v459 = vld [vmem:[%s449 + $0x48] sm:$0xff]
        %v460 = vld [vmem:[%s449 + $0x50] sm:$0xff]
        %v461 = vld [vmem:[%s449 + $0x58] sm:$0xff]
        %v462 = vld [vmem:[%s449 + $0x60] sm:$0xff]
        %v463 = vld [vmem:[%s449 + $0x68] sm:$0xff]
        %v464 = vld [vmem:[%s449 + $0x70] sm:$0xff]
        %v465 = vld [vmem:[%s449 + $0x78] sm:$0xff]
        %vm466 = vcmask 64512
        %v468 = vsel %vm466, %v450, 0
        %v471 = vsel %vm466, %v451, 0
        %v474 = vsel %vm466, %v452, 0
        %v477 = vsel %vm466, %v453, 0
        %v480 = vsel %vm466, %v454, 0
        %v483 = vsel %vm466, %v455, 0
        %v486 = vsel %vm466, %v456, 0
        %v489 = vsel %vm466, %v457, 0
        %v492 = vsel %vm466, %v458, 0
        %v495 = vsel %vm466, %v459, 0
        %v498 = vsel %vm466, %v460, 0
        %v501 = vsel %vm466, %v461, 0
        %v504 = vsel %vm466, %v462, 0
        %v507 = vsel %vm466, %v463, 0
        %v510 = vsel %vm466, %v464, 0
        %v513 = vsel %vm466, %v465, 0
        %515 = vmatpush.msra.mxu0 0.0
        %516 = vmatpush.msra.mxu0 0.0
        %517 = vmatpush.msra.mxu0 0.0
        %518 = vmatpush.msra.mxu0 0.0
        %519 = vmatpush.msra.mxu0 0.0
        %520 = vmatpush.msra.mxu0 0.0
        %521 = vmatpush.msra.mxu0 0.0
        %522 = vmatpush.msra.mxu0 0.0
        %523 = vmatpush.msra.mxu0 0.0
        %524 = vmatpush.msra.mxu0 0.0
        %525 = vmatpush.msra.mxu0 0.0
        %526 = vmatpush.msra.mxu0 0.0
        %527 = vmatpush.msra.mxu0 0.0
        %528 = vmatpush.msra.mxu0 0.0
        %529 = vmatpush.msra.mxu0 0.0
        %530 = vmatpush.msra.mxu0 %v387
        %531 = vmatmul.f32.gmra.mxu0 %v468
        %v532 = vpop.f32.mrf.mxu0
        %v533 = vadd.f32 0.0, %v532
        %534 = vmatmul.f32.gmra.mxu0 %v471
        %v535 = vpop.f32.mrf.mxu0
        %v536 = vadd.f32 0.0, %v535
        %537 = vmatmul.f32.gmra.mxu0 %v474
        %v538 = vpop.f32.mrf.mxu0
        %v539 = vadd.f32 0.0, %v538
        %540 = vmatmul.f32.gmra.mxu0 %v477
        %v541 = vpop.f32.mrf.mxu0
        %v542 = vadd.f32 0.0, %v541
        %543 = vmatmul.f32.gmra.mxu0 %v480
        %v544 = vpop.f32.mrf.mxu0
        %v545 = vadd.f32 0.0, %v544
        %546 = vmatmul.f32.gmra.mxu0 %v483
        %v547 = vpop.f32.mrf.mxu0
        %v548 = vadd.f32 0.0, %v547
        %549 = vmatmul.f32.gmra.mxu0 %v486
        %v550 = vpop.f32.mrf.mxu0
        %v551 = vadd.f32 0.0, %v550
        %552 = vmatmul.f32.gmra.mxu0 %v489
        %v553 = vpop.f32.mrf.mxu0
        %v554 = vadd.f32 0.0, %v553
        %555 = vmatmul.f32.gmra.mxu0 %v492
        %v556 = vpop.f32.mrf.mxu0
        %v557 = vadd.f32 0.0, %v556
        %558 = vmatmul.f32.gmra.mxu0 %v495
        %v559 = vpop.f32.mrf.mxu0
        %v560 = vadd.f32 0.0, %v559
        %561 = vmatmul.f32.gmra.mxu0 %v498
        %v562 = vpop.f32.mrf.mxu0
        %v563 = vadd.f32 0.0, %v562
        %564 = vmatmul.f32.gmra.mxu0 %v501
        %v565 = vpop.f32.mrf.mxu0
        %v566 = vadd.f32 0.0, %v565
        %567 = vmatmul.f32.gmra.mxu0 %v504
        %v568 = vpop.f32.mrf.mxu0
        %v569 = vadd.f32 0.0, %v568
        %570 = vmatmul.f32.gmra.mxu0 %v507
        %v571 = vpop.f32.mrf.mxu0
        %v572 = vadd.f32 0.0, %v571
        %573 = vmatmul.f32.gmra.mxu0 %v510
        %v574 = vpop.f32.mrf.mxu0
        %v575 = vadd.f32 0.0, %v574
        %576 = vmatmul.f32.gmra.mxu0 %v513
        %v577 = vpop.f32.mrf.mxu0
        %v578 = vadd.f32 0.0, %v577
        %579 = vdwg.mxu0
        %v581 = vperm.slane %v388, 0
        %v583 = vadd.f32 %v533, %v581
        %v584 = vadd.f32 %v536, %v581
        %v585 = vadd.f32 %v539, %v581
        %v586 = vadd.f32 %v542, %v581
        %v587 = vadd.f32 %v545, %v581
        %v588 = vadd.f32 %v548, %v581
        %v589 = vadd.f32 %v551, %v581
        %v590 = vadd.f32 %v554, %v581
        %v591 = vadd.f32 %v557, %v581
        %v592 = vadd.f32 %v560, %v581
        %v593 = vadd.f32 %v563, %v581
        %v594 = vadd.f32 %v566, %v581
        %v595 = vadd.f32 %v569, %v581
        %v596 = vadd.f32 %v572, %v581
        %v597 = vadd.f32 %v575, %v581
        %v598 = vadd.f32 %v578, %v581
        %v599 = vadd.f32 %v583, 3.0
        %v600 = vadd.f32 %v584, 3.0
        %v601 = vadd.f32 %v585, 3.0
        %v602 = vadd.f32 %v586, 3.0
        %v603 = vadd.f32 %v587, 3.0
        %v604 = vadd.f32 %v588, 3.0
        %v605 = vadd.f32 %v589, 3.0
        %v606 = vadd.f32 %v590, 3.0
        %v607 = vadd.f32 %v591, 3.0
        %v608 = vadd.f32 %v592, 3.0
        %v609 = vadd.f32 %v593, 3.0
        %v610 = vadd.f32 %v594, 3.0
        %v611 = vadd.f32 %v595, 3.0
        %v612 = vadd.f32 %v596, 3.0
        %v613 = vadd.f32 %v597, 3.0
        %v614 = vadd.f32 %v598, 3.0
        %v615 = vmax.f32 %v599, 0.0
        %v616 = vmax.f32 %v600, 0.0
        %v617 = vmax.f32 %v601, 0.0
        %v618 = vmax.f32 %v602, 0.0
        %v619 = vmax.f32 %v603, 0.0
        %v620 = vmax.f32 %v604, 0.0
        %v621 = vmax.f32 %v605, 0.0
        %v622 = vmax.f32 %v606, 0.0
        %v623 = vmax.f32 %v607, 0.0
        %v624 = vmax.f32 %v608, 0.0
        %v625 = vmax.f32 %v609, 0.0
        %v626 = vmax.f32 %v610, 0.0
        %v627 = vmax.f32 %v611, 0.0
        %v628 = vmax.f32 %v612, 0.0
        %v629 = vmax.f32 %v613, 0.0
        %v630 = vmax.f32 %v614, 0.0
        %v631 = vmin.f32 %v615, 6.0
        %v632 = vmin.f32 %v616, 6.0
        %v633 = vmin.f32 %v617, 6.0
        %v634 = vmin.f32 %v618, 6.0
        %v635 = vmin.f32 %v619, 6.0
        %v636 = vmin.f32 %v620, 6.0
        %v637 = vmin.f32 %v621, 6.0
        %v638 = vmin.f32 %v622, 6.0
        %v639 = vmin.f32 %v623, 6.0
        %v640 = vmin.f32 %v624, 6.0
        %v641 = vmin.f32 %v625, 6.0
        %v642 = vmin.f32 %v626, 6.0
        %v643 = vmin.f32 %v627, 6.0
        %v644 = vmin.f32 %v628, 6.0
        %v645 = vmin.f32 %v629, 6.0
        %v646 = vmin.f32 %v630, 6.0
        %v647 = vmul.f32 %v583, %v631
        %v648 = vmul.f32 %v584, %v632
        %v649 = vmul.f32 %v585, %v633
        %v650 = vmul.f32 %v586, %v634
        %v651 = vmul.f32 %v587, %v635
        %v652 = vmul.f32 %v588, %v636
        %v653 = vmul.f32 %v589, %v637
        %v654 = vmul.f32 %v590, %v638
        %v655 = vmul.f32 %v591, %v639
        %v656 = vmul.f32 %v592, %v640
        %v657 = vmul.f32 %v593, %v641
        %v658 = vmul.f32 %v594, %v642
        %v659 = vmul.f32 %v595, %v643
        %v660 = vmul.f32 %v596, %v644
        %v661 = vmul.f32 %v597, %v645
        %v662 = vmul.f32 %v598, %v646
        %v663 = vmul.f32 %v647, 0.16666667
        %v664 = vmul.f32 %v648, 0.16666667
        %v665 = vmul.f32 %v649, 0.16666667
        %v666 = vmul.f32 %v650, 0.16666667
        %v667 = vmul.f32 %v651, 0.16666667
        %v668 = vmul.f32 %v652, 0.16666667
        %v669 = vmul.f32 %v653, 0.16666667
        %v670 = vmul.f32 %v654, 0.16666667
        %v671 = vmul.f32 %v655, 0.16666667
        %v672 = vmul.f32 %v656, 0.16666667
        %v673 = vmul.f32 %v657, 0.16666667
        %v674 = vmul.f32 %v658, 0.16666667
        %v675 = vmul.f32 %v659, 0.16666667
        %v676 = vmul.f32 %v660, 0.16666667
        %v677 = vmul.f32 %v661, 0.16666667
        %v678 = vmul.f32 %v662, 0.16666667
        %s679 = sadd.s32 %s447, 1
        %s680 = smul.u32 %s679, 24
        %s681 = scalar_lea.vmem [#allocation2], %s680
        %682 = vst.msk [vmem:[%s681 + $0x1] sm:$0xff] %vm395, %v663
        %683 = vst.msk [vmem:[%s681 + $0x9] sm:$0xff] %vm395, %v664
        %684 = vst.msk [vmem:[%s681 + $0x19] sm:$0xff] %vm395, %v665
        %685 = vst.msk [vmem:[%s681 + $0x21] sm:$0xff] %vm395, %v666
        %686 = vst.msk [vmem:[%s681 + $0x31] sm:$0xff] %vm395, %v667
        %687 = vst.msk [vmem:[%s681 + $0x39] sm:$0xff] %vm395, %v668
        %688 = vst.msk [vmem:[%s681 + $0x49] sm:$0xff] %vm395, %v669
        %689 = vst.msk [vmem:[%s681 + $0x51] sm:$0xff] %vm395, %v670
        %690 = vst.msk [vmem:[%s681 + $0x61] sm:$0xff] %vm395, %v671
        %691 = vst.msk [vmem:[%s681 + $0x69] sm:$0xff] %vm395, %v672
        %692 = vst.msk [vmem:[%s681 + $0x79] sm:$0xff] %vm395, %v673
        %693 = vst.msk [vmem:[%s681 + $0x81] sm:$0xff] %vm395, %v674
        %694 = vst.msk [vmem:[%s681 + $0x91] sm:$0xff] %vm395, %v675
        %695 = vst.msk [vmem:[%s681 + $0x99] sm:$0xff] %vm395, %v676
        %696 = vst.msk [vmem:[%s681 + $0xa9] sm:$0xff] %vm395, %v677
        %697 = vst.msk [vmem:[%s681 + $0xb1] sm:$0xff] %vm395, %v678
      $region69: #{tpu_custom_call.1} parent=63 // loop_footer
        %s446 = sadd.s32 1, %s442
      $region70: #{tpu_custom_call.1} parent=63 // loop_footer_branch
        %441 = sbr.rel target = $region66
      $region71: #{tpu_custom_call.1} parent=63 // loop_exit
        _
      loop: start=0, step=1, limit=2
      $region72: #{tpu_custom_call.1} parent=63 // loop_pre_header
        _
      $region73: #{tpu_custom_call.1} parent=63 // loop_header
        %s699 = sphi 0, %s703
        %p700 = scmp.ge.s32.totalorder %s699, 2
        %v704 = vphi 0.0, %v1309
      $region74: #{tpu_custom_call.1} parent=63 // loop_header_branch
        %702 = sbr.rel (%p700) target = $region78
      $region75: #{tpu_custom_call.1} parent=63 // loop_body
        %s705 = smul.u32 %s699, 8
        %s706 = smul.u32 %s705, 24
        %s707 = scalar_lea.vmem [#allocation2], %s706
        %v708 = vld [vmem:[%s707] sm:$0xff]
        %v709 = vld [vmem:[%s707 + $0x8] sm:$0xff]
        %v710 = vld [vmem:[%s707 + $0x18] sm:$0xff]
        %v711 = vld [vmem:[%s707 + $0x20] sm:$0xff]
        %v712 = vld [vmem:[%s707 + $0x30] sm:$0xff]
        %v713 = vld [vmem:[%s707 + $0x38] sm:$0xff]
        %v714 = vld [vmem:[%s707 + $0x48] sm:$0xff]
        %v715 = vld [vmem:[%s707 + $0x50] sm:$0xff]
        %v716 = vld [vmem:[%s707 + $0x60] sm:$0xff]
        %v717 = vld [vmem:[%s707 + $0x68] sm:$0xff]
        %v718 = vld [vmem:[%s707 + $0x78] sm:$0xff]
        %v719 = vld [vmem:[%s707 + $0x80] sm:$0xff]
        %v720 = vld [vmem:[%s707 + $0x90] sm:$0xff]
        %v721 = vld [vmem:[%s707 + $0x98] sm:$0xff]
        %v722 = vld [vmem:[%s707 + $0xa8] sm:$0xff]
        %v723 = vld [vmem:[%s707 + $0xb0] sm:$0xff]
        %v724 = vperm.slane %v389, 0
        %v725 = vmul.f32 %v708, %v724
        %v726 = vmul.f32 %v709, %v724
        %v727 = vmul.f32 %v710, %v724
        %v728 = vmul.f32 %v711, %v724
        %v729 = vmul.f32 %v712, %v724
        %v730 = vmul.f32 %v713, %v724
        %v731 = vmul.f32 %v714, %v724
        %v732 = vmul.f32 %v715, %v724
        %v733 = vmul.f32 %v716, %v724
        %v734 = vmul.f32 %v717, %v724
        %v735 = vmul.f32 %v718, %v724
        %v736 = vmul.f32 %v719, %v724
        %v737 = vmul.f32 %v720, %v724
        %v738 = vmul.f32 %v721, %v724
        %v739 = vmul.f32 %v722, %v724
        %v740 = vmul.f32 %v723, %v724
        %v741 = vadd.f32 %v725, 0.0
        %v742 = vadd.f32 %v726, 0.0
        %v743 = vadd.f32 %v727, 0.0
        %v744 = vadd.f32 %v728, 0.0
        %v745 = vadd.f32 %v729, 0.0
        %v746 = vadd.f32 %v730, 0.0
        %v747 = vadd.f32 %v731, 0.0
        %v748 = vadd.f32 %v732, 0.0
        %v749 = vadd.f32 %v733, 0.0
        %v750 = vadd.f32 %v734, 0.0
        %v751 = vadd.f32 %v735, 0.0
        %v752 = vadd.f32 %v736, 0.0
        %v753 = vadd.f32 %v737, 0.0
        %v754 = vadd.f32 %v738, 0.0
        %v755 = vadd.f32 %v739, 0.0
        %v756 = vadd.f32 %v740, 0.0
        %v757 = vld [vmem:[%s707 + $0x1] sm:$0xff]
        %v758 = vld [vmem:[%s707 + $0x9] sm:$0xff]
        %v759 = vld [vmem:[%s707 + $0x19] sm:$0xff]
        %v760 = vld [vmem:[%s707 + $0x21] sm:$0xff]
        %v761 = vld [vmem:[%s707 + $0x31] sm:$0xff]
        %v762 = vld [vmem:[%s707 + $0x39] sm:$0xff]
        %v763 = vld [vmem:[%s707 + $0x49] sm:$0xff]
        %v764 = vld [vmem:[%s707 + $0x51] sm:$0xff]
        %v765 = vld [vmem:[%s707 + $0x61] sm:$0xff]
        %v766 = vld [vmem:[%s707 + $0x69] sm:$0xff]
        %v767 = vld [vmem:[%s707 + $0x79] sm:$0xff]
        %v768 = vld [vmem:[%s707 + $0x81] sm:$0xff]
        %v769 = vld [vmem:[%s707 + $0x91] sm:$0xff]
        %v770 = vld [vmem:[%s707 + $0x99] sm:$0xff]
        %v771 = vld [vmem:[%s707 + $0xa9] sm:$0xff]
        %v772 = vld [vmem:[%s707 + $0xb1] sm:$0xff]
        %v773 = vperm.slane %v389, 1
        %v774 = vmul.f32 %v757, %v773
        %v775 = vmul.f32 %v758, %v773
        %v776 = vmul.f32 %v759, %v773
        %v777 = vmul.f32 %v760, %v773
        %v778 = vmul.f32 %v761, %v773
        %v779 = vmul.f32 %v762, %v773
        %v780 = vmul.f32 %v763, %v773
        %v781 = vmul.f32 %v764, %v773
        %v782 = vmul.f32 %v765, %v773
        %v783 = vmul.f32 %v766, %v773
        %v784 = vmul.f32 %v767, %v773
        %v785 = vmul.f32 %v768, %v773
        %v786 = vmul.f32 %v769, %v773
        %v787 = vmul.f32 %v770, %v773
        %v788 = vmul.f32 %v771, %v773
        %v789 = vmul.f32 %v772, %v773
        %v790 = vadd.f32 %v741, %v774
        %v791 = vadd.f32 %v742, %v775
        %v792 = vadd.f32 %v743, %v776
        %v793 = vadd.f32 %v744, %v777
        %v794 = vadd.f32 %v745, %v778
        %v795 = vadd.f32 %v746, %v779
        %v796 = vadd.f32 %v747, %v780
        %v797 = vadd.f32 %v748, %v781
        %v798 = vadd.f32 %v749, %v782
        %v799 = vadd.f32 %v750, %v783
        %v800 = vadd.f32 %v751, %v784
        %v801 = vadd.f32 %v752, %v785
        %v802 = vadd.f32 %v753, %v786
        %v803 = vadd.f32 %v754, %v787
        %v804 = vadd.f32 %v755, %v788
        %v805 = vadd.f32 %v756, %v789
        %v806 = vld [vmem:[%s707 + $0x2] sm:$0xff]
        %v807 = vld [vmem:[%s707 + $0xa] sm:$0xff]
        %v808 = vld [vmem:[%s707 + $0x1a] sm:$0xff]
        %v809 = vld [vmem:[%s707 + $0x22] sm:$0xff]
        %v810 = vld [vmem:[%s707 + $0x32] sm:$0xff]
        %v811 = vld [vmem:[%s707 + $0x3a] sm:$0xff]
        %v812 = vld [vmem:[%s707 + $0x4a] sm:$0xff]
        %v813 = vld [vmem:[%s707 + $0x52] sm:$0xff]
        %v814 = vld [vmem:[%s707 + $0x62] sm:$0xff]
        %v815 = vld [vmem:[%s707 + $0x6a] sm:$0xff]
        %v816 = vld [vmem:[%s707 + $0x7a] sm:$0xff]
        %v817 = vld [vmem:[%s707 + $0x82] sm:$0xff]
        %v818 = vld [vmem:[%s707 + $0x92] sm:$0xff]
        %v819 = vld [vmem:[%s707 + $0x9a] sm:$0xff]
        %v820 = vld [vmem:[%s707 + $0xaa] sm:$0xff]
        %v821 = vld [vmem:[%s707 + $0xb2] sm:$0xff]
        %v822 = vperm.slane %v389, 2
        %v823 = vmul.f32 %v806, %v822
        %v824 = vmul.f32 %v807, %v822
        %v825 = vmul.f32 %v808, %v822
        %v826 = vmul.f32 %v809, %v822
        %v827 = vmul.f32 %v810, %v822
        %v828 = vmul.f32 %v811, %v822
        %v829 = vmul.f32 %v812, %v822
        %v830 = vmul.f32 %v813, %v822
        %v831 = vmul.f32 %v814, %v822
        %v832 = vmul.f32 %v815, %v822
        %v833 = vmul.f32 %v816, %v822
        %v834 = vmul.f32 %v817, %v822
        %v835 = vmul.f32 %v818, %v822
        %v836 = vmul.f32 %v819, %v822
        %v837 = vmul.f32 %v820, %v822
        %v838 = vmul.f32 %v821, %v822
        %v839 = vadd.f32 %v790, %v823
        %v840 = vadd.f32 %v791, %v824
        %v841 = vadd.f32 %v792, %v825
        %v842 = vadd.f32 %v793, %v826
        %v843 = vadd.f32 %v794, %v827
        %v844 = vadd.f32 %v795, %v828
        %v845 = vadd.f32 %v796, %v829
        %v846 = vadd.f32 %v797, %v830
        %v847 = vadd.f32 %v798, %v831
        %v848 = vadd.f32 %v799, %v832
        %v849 = vadd.f32 %v800, %v833
        %v850 = vadd.f32 %v801, %v834
        %v851 = vadd.f32 %v802, %v835
        %v852 = vadd.f32 %v803, %v836
        %v853 = vadd.f32 %v804, %v837
        %v854 = vadd.f32 %v805, %v838
        %s855 = sadd.s32 %s705, 1
        %s856 = smul.u32 %s855, 24
        %s857 = scalar_lea.vmem [#allocation2], %s856
        %v858 = vld [vmem:[%s857] sm:$0xff]
        %v859 = vld [vmem:[%s857 + $0x8] sm:$0xff]
        %v860 = vld [vmem:[%s857 + $0x18] sm:$0xff]
        %v861 = vld [vmem:[%s857 + $0x20] sm:$0xff]
        %v862 = vld [vmem:[%s857 + $0x30] sm:$0xff]
        %v863 = vld [vmem:[%s857 + $0x38] sm:$0xff]
        %v864 = vld [vmem:[%s857 + $0x48] sm:$0xff]
        %v865 = vld [vmem:[%s857 + $0x50] sm:$0xff]
        %v866 = vld [vmem:[%s857 + $0x60] sm:$0xff]
        %v867 = vld [vmem:[%s857 + $0x68] sm:$0xff]
        %v868 = vld [vmem:[%s857 + $0x78] sm:$0xff]
        %v869 = vld [vmem:[%s857 + $0x80] sm:$0xff]
        %v870 = vld [vmem:[%s857 + $0x90] sm:$0xff]
        %v871 = vld [vmem:[%s857 + $0x98] sm:$0xff]
        %v872 = vld [vmem:[%s857 + $0xa8] sm:$0xff]
        %v873 = vld [vmem:[%s857 + $0xb0] sm:$0xff]
        %v874 = vperm.slane %v389, 3
        %v875 = vmul.f32 %v858, %v874
        %v876 = vmul.f32 %v859, %v874
        %v877 = vmul.f32 %v860, %v874
        %v878 = vmul.f32 %v861, %v874
        %v879 = vmul.f32 %v862, %v874
        %v880 = vmul.f32 %v863, %v874
        %v881 = vmul.f32 %v864, %v874
        %v882 = vmul.f32 %v865, %v874
        %v883 = vmul.f32 %v866, %v874
        %v884 = vmul.f32 %v867, %v874
        %v885 = vmul.f32 %v868, %v874
        %v886 = vmul.f32 %v869, %v874
        %v887 = vmul.f32 %v870, %v874
        %v888 = vmul.f32 %v871, %v874
        %v889 = vmul.f32 %v872, %v874
        %v890 = vmul.f32 %v873, %v874
        %v891 = vadd.f32 %v839, %v875
        %v892 = vadd.f32 %v840, %v876
        %v893 = vadd.f32 %v841, %v877
        %v894 = vadd.f32 %v842, %v878
        %v895 = vadd.f32 %v843, %v879
        %v896 = vadd.f32 %v844, %v880
        %v897 = vadd.f32 %v845, %v881
        %v898 = vadd.f32 %v846, %v882
        %v899 = vadd.f32 %v847, %v883
        %v900 = vadd.f32 %v848, %v884
        %v901 = vadd.f32 %v849, %v885
        %v902 = vadd.f32 %v850, %v886
        %v903 = vadd.f32 %v851, %v887
        %v904 = vadd.f32 %v852, %v888
        %v905 = vadd.f32 %v853, %v889
        %v906 = vadd.f32 %v854, %v890
        %v907 = vld [vmem:[%s857 + $0x1] sm:$0xff]
        %v908 = vld [vmem:[%s857 + $0x9] sm:$0xff]
        %v909 = vld [vmem:[%s857 + $0x19] sm:$0xff]
        %v910 = vld [vmem:[%s857 + $0x21] sm:$0xff]
        %v911 = vld [vmem:[%s857 + $0x31] sm:$0xff]
        %v912 = vld [vmem:[%s857 + $0x39] sm:$0xff]
        %v913 = vld [vmem:[%s857 + $0x49] sm:$0xff]
        %v914 = vld [vmem:[%s857 + $0x51] sm:$0xff]
        %v915 = vld [vmem:[%s857 + $0x61] sm:$0xff]
        %v916 = vld [vmem:[%s857 + $0x69] sm:$0xff]
        %v917 = vld [vmem:[%s857 + $0x79] sm:$0xff]
        %v918 = vld [vmem:[%s857 + $0x81] sm:$0xff]
        %v919 = vld [vmem:[%s857 + $0x91] sm:$0xff]
        %v920 = vld [vmem:[%s857 + $0x99] sm:$0xff]
        %v921 = vld [vmem:[%s857 + $0xa9] sm:$0xff]
        %v922 = vld [vmem:[%s857 + $0xb1] sm:$0xff]
        %v923 = vperm.slane %v389, 4
        %v924 = vmul.f32 %v907, %v923
        %v925 = vmul.f32 %v908, %v923
        %v926 = vmul.f32 %v909, %v923
        %v927 = vmul.f32 %v910, %v923
        %v928 = vmul.f32 %v911, %v923
        %v929 = vmul.f32 %v912, %v923
        %v930 = vmul.f32 %v913, %v923
        %v931 = vmul.f32 %v914, %v923
        %v932 = vmul.f32 %v915, %v923
        %v933 = vmul.f32 %v916, %v923
        %v934 = vmul.f32 %v917, %v923
        %v935 = vmul.f32 %v918, %v923
        %v936 = vmul.f32 %v919, %v923
        %v937 = vmul.f32 %v920, %v923
        %v938 = vmul.f32 %v921, %v923
        %v939 = vmul.f32 %v922, %v923
        %v940 = vadd.f32 %v891, %v924
        %v941 = vadd.f32 %v892, %v925
        %v942 = vadd.f32 %v893, %v926
        %v943 = vadd.f32 %v894, %v927
        %v944 = vadd.f32 %v895, %v928
        %v945 = vadd.f32 %v896, %v929
        %v946 = vadd.f32 %v897, %v930
        %v947 = vadd.f32 %v898, %v931
        %v948 = vadd.f32 %v899, %v932
        %v949 = vadd.f32 %v900, %v933
        %v950 = vadd.f32 %v901, %v934
        %v951 = vadd.f32 %v902, %v935
        %v952 = vadd.f32 %v903, %v936
        %v953 = vadd.f32 %v904, %v937
        %v954 = vadd.f32 %v905, %v938
        %v955 = vadd.f32 %v906, %v939
        %v956 = vld [vmem:[%s857 + $0x2] sm:$0xff]
        %v957 = vld [vmem:[%s857 + $0xa] sm:$0xff]
        %v958 = vld [vmem:[%s857 + $0x1a] sm:$0xff]
        %v959 = vld [vmem:[%s857 + $0x22] sm:$0xff]
        %v960 = vld [vmem:[%s857 + $0x32] sm:$0xff]
        %v961 = vld [vmem:[%s857 + $0x3a] sm:$0xff]
        %v962 = vld [vmem:[%s857 + $0x4a] sm:$0xff]
        %v963 = vld [vmem:[%s857 + $0x52] sm:$0xff]
        %v964 = vld [vmem:[%s857 + $0x62] sm:$0xff]
        %v965 = vld [vmem:[%s857 + $0x6a] sm:$0xff]
        %v966 = vld [vmem:[%s857 + $0x7a] sm:$0xff]
        %v967 = vld [vmem:[%s857 + $0x82] sm:$0xff]
        %v968 = vld [vmem:[%s857 + $0x92] sm:$0xff]
        %v969 = vld [vmem:[%s857 + $0x9a] sm:$0xff]
        %v970 = vld [vmem:[%s857 + $0xaa] sm:$0xff]
        %v971 = vld [vmem:[%s857 + $0xb2] sm:$0xff]
        %v972 = vperm.slane %v389, 5
        %v973 = vmul.f32 %v956, %v972
        %v974 = vmul.f32 %v957, %v972
        %v975 = vmul.f32 %v958, %v972
        %v976 = vmul.f32 %v959, %v972
        %v977 = vmul.f32 %v960, %v972
        %v978 = vmul.f32 %v961, %v972
        %v979 = vmul.f32 %v962, %v972
        %v980 = vmul.f32 %v963, %v972
        %v981 = vmul.f32 %v964, %v972
        %v982 = vmul.f32 %v965, %v972
        %v983 = vmul.f32 %v966, %v972
        %v984 = vmul.f32 %v967, %v972
        %v985 = vmul.f32 %v968, %v972
        %v986 = vmul.f32 %v969, %v972
        %v987 = vmul.f32 %v970, %v972
        %v988 = vmul.f32 %v971, %v972
        %v989 = vadd.f32 %v940, %v973
        %v990 = vadd.f32 %v941, %v974
        %v991 = vadd.f32 %v942, %v975
        %v992 = vadd.f32 %v943, %v976
        %v993 = vadd.f32 %v944, %v977
        %v994 = vadd.f32 %v945, %v978
        %v995 = vadd.f32 %v946, %v979
        %v996 = vadd.f32 %v947, %v980
        %v997 = vadd.f32 %v948, %v981
        %v998 = vadd.f32 %v949, %v982
        %v999 = vadd.f32 %v950, %v983
        %v1000 = vadd.f32 %v951, %v984
        %v1001 = vadd.f32 %v952, %v985
        %v1002 = vadd.f32 %v953, %v986
        %v1003 = vadd.f32 %v954, %v987
        %v1004 = vadd.f32 %v955, %v988
        %s1005 = sadd.s32 %s705, 2
        %s1006 = smul.u32 %s1005, 24
        %s1007 = scalar_lea.vmem [#allocation2], %s1006
        %v1008 = vld [vmem:[%s1007] sm:$0xff]
        %v1009 = vld [vmem:[%s1007 + $0x8] sm:$0xff]
        %v1010 = vld [vmem:[%s1007 + $0x18] sm:$0xff]
        %v1011 = vld [vmem:[%s1007 + $0x20] sm:$0xff]
        %v1012 = vld [vmem:[%s1007 + $0x30] sm:$0xff]
        %v1013 = vld [vmem:[%s1007 + $0x38] sm:$0xff]
        %v1014 = vld [vmem:[%s1007 + $0x48] sm:$0xff]
        %v1015 = vld [vmem:[%s1007 + $0x50] sm:$0xff]
        %v1016 = vld [vmem:[%s1007 + $0x60] sm:$0xff]
        %v1017 = vld [vmem:[%s1007 + $0x68] sm:$0xff]
        %v1018 = vld [vmem:[%s1007 + $0x78] sm:$0xff]
        %v1019 = vld [vmem:[%s1007 + $0x80] sm:$0xff]
        %v1020 = vld [vmem:[%s1007 + $0x90] sm:$0xff]
        %v1021 = vld [vmem:[%s1007 + $0x98] sm:$0xff]
        %v1022 = vld [vmem:[%s1007 + $0xa8] sm:$0xff]
        %v1023 = vld [vmem:[%s1007 + $0xb0] sm:$0xff]
        %v1024 = vperm.slane %v389, 6
        %v1025 = vmul.f32 %v1008, %v1024
        %v1026 = vmul.f32 %v1009, %v1024
        %v1027 = vmul.f32 %v1010, %v1024
        %v1028 = vmul.f32 %v1011, %v1024
        %v1029 = vmul.f32 %v1012, %v1024
        %v1030 = vmul.f32 %v1013, %v1024
        %v1031 = vmul.f32 %v1014, %v1024
        %v1032 = vmul.f32 %v1015, %v1024
        %v1033 = vmul.f32 %v1016, %v1024
        %v1034 = vmul.f32 %v1017, %v1024
        %v1035 = vmul.f32 %v1018, %v1024
        %v1036 = vmul.f32 %v1019, %v1024
        %v1037 = vmul.f32 %v1020, %v1024
        %v1038 = vmul.f32 %v1021, %v1024
        %v1039 = vmul.f32 %v1022, %v1024
        %v1040 = vmul.f32 %v1023, %v1024
        %v1041 = vadd.f32 %v989, %v1025
        %v1042 = vadd.f32 %v990, %v1026
        %v1043 = vadd.f32 %v991, %v1027
        %v1044 = vadd.f32 %v992, %v1028
        %v1045 = vadd.f32 %v993, %v1029
        %v1046 = vadd.f32 %v994, %v1030
        %v1047 = vadd.f32 %v995, %v1031
        %v1048 = vadd.f32 %v996, %v1032
        %v1049 = vadd.f32 %v997, %v1033
        %v1050 = vadd.f32 %v998, %v1034
        %v1051 = vadd.f32 %v999, %v1035
        %v1052 = vadd.f32 %v1000, %v1036
        %v1053 = vadd.f32 %v1001, %v1037
        %v1054 = vadd.f32 %v1002, %v1038
        %v1055 = vadd.f32 %v1003, %v1039
        %v1056 = vadd.f32 %v1004, %v1040
        %v1057 = vld [vmem:[%s1007 + $0x1] sm:$0xff]
        %v1058 = vld [vmem:[%s1007 + $0x9] sm:$0xff]
        %v1059 = vld [vmem:[%s1007 + $0x19] sm:$0xff]
        %v1060 = vld [vmem:[%s1007 + $0x21] sm:$0xff]
        %v1061 = vld [vmem:[%s1007 + $0x31] sm:$0xff]
        %v1062 = vld [vmem:[%s1007 + $0x39] sm:$0xff]
        %v1063 = vld [vmem:[%s1007 + $0x49] sm:$0xff]
        %v1064 = vld [vmem:[%s1007 + $0x51] sm:$0xff]
        %v1065 = vld [vmem:[%s1007 + $0x61] sm:$0xff]
        %v1066 = vld [vmem:[%s1007 + $0x69] sm:$0xff]
        %v1067 = vld [vmem:[%s1007 + $0x79] sm:$0xff]
        %v1068 = vld [vmem:[%s1007 + $0x81] sm:$0xff]
        %v1069 = vld [vmem:[%s1007 + $0x91] sm:$0xff]
        %v1070 = vld [vmem:[%s1007 + $0x99] sm:$0xff]
        %v1071 = vld [vmem:[%s1007 + $0xa9] sm:$0xff]
        %v1072 = vld [vmem:[%s1007 + $0xb1] sm:$0xff]
        %v1073 = vperm.slane %v389, 7
        %v1074 = vmul.f32 %v1057, %v1073
        %v1075 = vmul.f32 %v1058, %v1073
        %v1076 = vmul.f32 %v1059, %v1073
        %v1077 = vmul.f32 %v1060, %v1073
        %v1078 = vmul.f32 %v1061, %v1073
        %v1079 = vmul.f32 %v1062, %v1073
        %v1080 = vmul.f32 %v1063, %v1073
        %v1081 = vmul.f32 %v1064, %v1073
        %v1082 = vmul.f32 %v1065, %v1073
        %v1083 = vmul.f32 %v1066, %v1073
        %v1084 = vmul.f32 %v1067, %v1073
        %v1085 = vmul.f32 %v1068, %v1073
        %v1086 = vmul.f32 %v1069, %v1073
        %v1087 = vmul.f32 %v1070, %v1073
        %v1088 = vmul.f32 %v1071, %v1073
        %v1089 = vmul.f32 %v1072, %v1073
        %v1090 = vadd.f32 %v1041, %v1074
        %v1091 = vadd.f32 %v1042, %v1075
        %v1092 = vadd.f32 %v1043, %v1076
        %v1093 = vadd.f32 %v1044, %v1077
        %v1094 = vadd.f32 %v1045, %v1078
        %v1095 = vadd.f32 %v1046, %v1079
        %v1096 = vadd.f32 %v1047, %v1080
        %v1097 = vadd.f32 %v1048, %v1081
        %v1098 = vadd.f32 %v1049, %v1082
        %v1099 = vadd.f32 %v1050, %v1083
        %v1100 = vadd.f32 %v1051, %v1084
        %v1101 = vadd.f32 %v1052, %v1085
        %v1102 = vadd.f32 %v1053, %v1086
        %v1103 = vadd.f32 %v1054, %v1087
        %v1104 = vadd.f32 %v1055, %v1088
        %v1105 = vadd.f32 %v1056, %v1089
        %v1106 = vld [vmem:[%s1007 + $0x2] sm:$0xff]
        %v1107 = vld [vmem:[%s1007 + $0xa] sm:$0xff]
        %v1108 = vld [vmem:[%s1007 + $0x1a] sm:$0xff]
        %v1109 = vld [vmem:[%s1007 + $0x22] sm:$0xff]
        %v1110 = vld [vmem:[%s1007 + $0x32] sm:$0xff]
        %v1111 = vld [vmem:[%s1007 + $0x3a] sm:$0xff]
        %v1112 = vld [vmem:[%s1007 + $0x4a] sm:$0xff]
        %v1113 = vld [vmem:[%s1007 + $0x52] sm:$0xff]
        %v1114 = vld [vmem:[%s1007 + $0x62] sm:$0xff]
        %v1115 = vld [vmem:[%s1007 + $0x6a] sm:$0xff]
        %v1116 = vld [vmem:[%s1007 + $0x7a] sm:$0xff]
        %v1117 = vld [vmem:[%s1007 + $0x82] sm:$0xff]
        %v1118 = vld [vmem:[%s1007 + $0x92] sm:$0xff]
        %v1119 = vld [vmem:[%s1007 + $0x9a] sm:$0xff]
        %v1120 = vld [vmem:[%s1007 + $0xaa] sm:$0xff]
        %v1121 = vld [vmem:[%s1007 + $0xb2] sm:$0xff]
        %v1122 = vperm.slane %v390, 0
        %v1123 = vmul.f32 %v1106, %v1122
        %v1124 = vmul.f32 %v1107, %v1122
        %v1125 = vmul.f32 %v1108, %v1122
        %v1126 = vmul.f32 %v1109, %v1122
        %v1127 = vmul.f32 %v1110, %v1122
        %v1128 = vmul.f32 %v1111, %v1122
        %v1129 = vmul.f32 %v1112, %v1122
        %v1130 = vmul.f32 %v1113, %v1122
        %v1131 = vmul.f32 %v1114, %v1122
        %v1132 = vmul.f32 %v1115, %v1122
        %v1133 = vmul.f32 %v1116, %v1122
        %v1134 = vmul.f32 %v1117, %v1122
        %v1135 = vmul.f32 %v1118, %v1122
        %v1136 = vmul.f32 %v1119, %v1122
        %v1137 = vmul.f32 %v1120, %v1122
        %v1138 = vmul.f32 %v1121, %v1122
        %v1139 = vadd.f32 %v1090, %v1123
        %v1140 = vadd.f32 %v1091, %v1124
        %v1141 = vadd.f32 %v1092, %v1125
        %v1142 = vadd.f32 %v1093, %v1126
        %v1143 = vadd.f32 %v1094, %v1127
        %v1144 = vadd.f32 %v1095, %v1128
        %v1145 = vadd.f32 %v1096, %v1129
        %v1146 = vadd.f32 %v1097, %v1130
        %v1147 = vadd.f32 %v1098, %v1131
        %v1148 = vadd.f32 %v1099, %v1132
        %v1149 = vadd.f32 %v1100, %v1133
        %v1150 = vadd.f32 %v1101, %v1134
        %v1151 = vadd.f32 %v1102, %v1135
        %v1152 = vadd.f32 %v1103, %v1136
        %v1153 = vadd.f32 %v1104, %v1137
        %v1154 = vadd.f32 %v1105, %v1138
        %v1156 = vperm.slane %v391, 0
        %v1158 = vadd.f32 %v1139, %v1156
        %v1159 = vadd.f32 %v1140, %v1156
        %v1160 = vadd.f32 %v1141, %v1156
        %v1161 = vadd.f32 %v1142, %v1156
        %v1162 = vadd.f32 %v1143, %v1156
        %v1163 = vadd.f32 %v1144, %v1156
        %v1164 = vadd.f32 %v1145, %v1156
        %v1165 = vadd.f32 %v1146, %v1156
        %v1166 = vadd.f32 %v1147, %v1156
        %v1167 = vadd.f32 %v1148, %v1156
        %v1168 = vadd.f32 %v1149, %v1156
        %v1169 = vadd.f32 %v1150, %v1156
        %v1170 = vadd.f32 %v1151, %v1156
        %v1171 = vadd.f32 %v1152, %v1156
        %v1172 = vadd.f32 %v1153, %v1156
        %v1173 = vadd.f32 %v1154, %v1156
        %v1174 = vadd.f32 %v1158, 3.0
        %v1175 = vadd.f32 %v1159, 3.0
        %v1176 = vadd.f32 %v1160, 3.0
        %v1177 = vadd.f32 %v1161, 3.0
        %v1178 = vadd.f32 %v1162, 3.0
        %v1179 = vadd.f32 %v1163, 3.0
        %v1180 = vadd.f32 %v1164, 3.0
        %v1181 = vadd.f32 %v1165, 3.0
        %v1182 = vadd.f32 %v1166, 3.0
        %v1183 = vadd.f32 %v1167, 3.0
        %v1184 = vadd.f32 %v1168, 3.0
        %v1185 = vadd.f32 %v1169, 3.0
        %v1186 = vadd.f32 %v1170, 3.0
        %v1187 = vadd.f32 %v1171, 3.0
        %v1188 = vadd.f32 %v1172, 3.0
        %v1189 = vadd.f32 %v1173, 3.0
        %v1190 = vmax.f32 %v1174, 0.0
        %v1191 = vmax.f32 %v1175, 0.0
        %v1192 = vmax.f32 %v1176, 0.0
        %v1193 = vmax.f32 %v1177, 0.0
        %v1194 = vmax.f32 %v1178, 0.0
        %v1195 = vmax.f32 %v1179, 0.0
        %v1196 = vmax.f32 %v1180, 0.0
        %v1197 = vmax.f32 %v1181, 0.0
        %v1198 = vmax.f32 %v1182, 0.0
        %v1199 = vmax.f32 %v1183, 0.0
        %v1200 = vmax.f32 %v1184, 0.0
        %v1201 = vmax.f32 %v1185, 0.0
        %v1202 = vmax.f32 %v1186, 0.0
        %v1203 = vmax.f32 %v1187, 0.0
        %v1204 = vmax.f32 %v1188, 0.0
        %v1205 = vmax.f32 %v1189, 0.0
        %v1206 = vmin.f32 %v1190, 6.0
        %v1207 = vmin.f32 %v1191, 6.0
        %v1208 = vmin.f32 %v1192, 6.0
        %v1209 = vmin.f32 %v1193, 6.0
        %v1210 = vmin.f32 %v1194, 6.0
        %v1211 = vmin.f32 %v1195, 6.0
        %v1212 = vmin.f32 %v1196, 6.0
        %v1213 = vmin.f32 %v1197, 6.0
        %v1214 = vmin.f32 %v1198, 6.0
        %v1215 = vmin.f32 %v1199, 6.0
        %v1216 = vmin.f32 %v1200, 6.0
        %v1217 = vmin.f32 %v1201, 6.0
        %v1218 = vmin.f32 %v1202, 6.0
        %v1219 = vmin.f32 %v1203, 6.0
        %v1220 = vmin.f32 %v1204, 6.0
        %v1221 = vmin.f32 %v1205, 6.0
        %v1222 = vmul.f32 %v1158, %v1206
        %v1223 = vmul.f32 %v1159, %v1207
        %v1224 = vmul.f32 %v1160, %v1208
        %v1225 = vmul.f32 %v1161, %v1209
        %v1226 = vmul.f32 %v1162, %v1210
        %v1227 = vmul.f32 %v1163, %v1211
        %v1228 = vmul.f32 %v1164, %v1212
        %v1229 = vmul.f32 %v1165, %v1213
        %v1230 = vmul.f32 %v1166, %v1214
        %v1231 = vmul.f32 %v1167, %v1215
        %v1232 = vmul.f32 %v1168, %v1216
        %v1233 = vmul.f32 %v1169, %v1217
        %v1234 = vmul.f32 %v1170, %v1218
        %v1235 = vmul.f32 %v1171, %v1219
        %v1236 = vmul.f32 %v1172, %v1220
        %v1237 = vmul.f32 %v1173, %v1221
        %v1238 = vmul.f32 %v1222, 0.16666667
        %v1239 = vmul.f32 %v1223, 0.16666667
        %v1240 = vmul.f32 %v1224, 0.16666667
        %v1241 = vmul.f32 %v1225, 0.16666667
        %v1242 = vmul.f32 %v1226, 0.16666667
        %v1243 = vmul.f32 %v1227, 0.16666667
        %v1244 = vmul.f32 %v1228, 0.16666667
        %v1245 = vmul.f32 %v1229, 0.16666667
        %v1246 = vmul.f32 %v1230, 0.16666667
        %v1247 = vmul.f32 %v1231, 0.16666667
        %v1248 = vmul.f32 %v1232, 0.16666667
        %v1249 = vmul.f32 %v1233, 0.16666667
        %v1250 = vmul.f32 %v1234, 0.16666667
        %v1251 = vmul.f32 %v1235, 0.16666667
        %v1252 = vmul.f32 %v1236, 0.16666667
        %v1253 = vmul.f32 %v1237, 0.16666667
        %s1254 = smul.u32 %s705, 16
        %s1255 = scalar_lea.vmem [#allocation3], %s1254
        %1256 = vst.msk [vmem:[%s1255] sm:$0xff] %vm395, %v1238
        %1257 = vst.msk [vmem:[%s1255 + $0x8] sm:$0xff] %vm395, %v1239
        %1258 = vst.msk [vmem:[%s1255 + $0x10] sm:$0xff] %vm395, %v1240
        %1259 = vst.msk [vmem:[%s1255 + $0x18] sm:$0xff] %vm395, %v1241
        %1260 = vst.msk [vmem:[%s1255 + $0x20] sm:$0xff] %vm395, %v1242
        %1261 = vst.msk [vmem:[%s1255 + $0x28] sm:$0xff] %vm395, %v1243
        %1262 = vst.msk [vmem:[%s1255 + $0x30] sm:$0xff] %vm395, %v1244
        %1263 = vst.msk [vmem:[%s1255 + $0x38] sm:$0xff] %vm395, %v1245
        %1264 = vst.msk [vmem:[%s1255 + $0x40] sm:$0xff] %vm395, %v1246
        %1265 = vst.msk [vmem:[%s1255 + $0x48] sm:$0xff] %vm395, %v1247
        %1266 = vst.msk [vmem:[%s1255 + $0x50] sm:$0xff] %vm395, %v1248
        %1267 = vst.msk [vmem:[%s1255 + $0x58] sm:$0xff] %vm395, %v1249
        %1268 = vst.msk [vmem:[%s1255 + $0x60] sm:$0xff] %vm395, %v1250
        %1269 = vst.msk [vmem:[%s1255 + $0x68] sm:$0xff] %vm395, %v1251
        %1270 = vst.msk [vmem:[%s1255 + $0x70] sm:$0xff] %vm395, %v1252
        %1271 = vst.msk [vmem:[%s1255 + $0x78] sm:$0xff] %vm395, %v1253
        %v1272 = vsel %vm395, %v1238, 0.0
        %v1273 = vsel %vm395, %v1239, 0.0
        %v1274 = vadd.f32 %v1272, %v1273
        %v1275 = vsel %vm395, %v1240, 0.0
        %v1276 = vadd.f32 %v1274, %v1275
        %v1277 = vsel %vm395, %v1241, 0.0
        %v1278 = vadd.f32 %v1276, %v1277
        %v1279 = vsel %vm395, %v1242, 0.0
        %v1280 = vadd.f32 %v1278, %v1279
        %v1281 = vsel %vm395, %v1243, 0.0
        %v1282 = vadd.f32 %v1280, %v1281
        %v1283 = vsel %vm395, %v1244, 0.0
        %v1284 = vadd.f32 %v1282, %v1283
        %v1285 = vsel %vm395, %v1245, 0.0
        %v1286 = vadd.f32 %v1284, %v1285
        %v1287 = vsel %vm395, %v1246, 0.0
        %v1288 = vadd.f32 %v1286, %v1287
        %v1289 = vsel %vm395, %v1247, 0.0
        %v1290 = vadd.f32 %v1288, %v1289
        %v1291 = vsel %vm395, %v1248, 0.0
        %v1292 = vadd.f32 %v1290, %v1291
        %v1293 = vsel %vm395, %v1249, 0.0
        %v1294 = vadd.f32 %v1292, %v1293
        %v1295 = vsel %vm395, %v1250, 0.0
        %v1296 = vadd.f32 %v1294, %v1295
        %v1297 = vsel %vm395, %v1251, 0.0
        %v1298 = vadd.f32 %v1296, %v1297
        %v1299 = vsel %vm395, %v1252, 0.0
        %v1300 = vadd.f32 %v1298, %v1299
        %v1301 = vsel %vm395, %v1253, 0.0
        %v1302 = vadd.f32 %v1300, %v1301
        %v1303 = vrot.slane %v1302, 4
        %v1304 = vadd.f32 %v1302, %v1303
        %v1305 = vrot.slane %v1304, 2
        %v1306 = vadd.f32 %v1304, %v1305
        %v1307 = vrot.slane %v1306, 1
        %v1308 = vadd.f32 %v1306, %v1307
        %v1309 = vadd.f32 %v704, %v1308
      $region76: #{tpu_custom_call.1} parent=63 // loop_footer
        %s703 = sadd.s32 1, %s699
      $region77: #{tpu_custom_call.1} parent=63 // loop_footer_branch
        %698 = sbr.rel target = $region73
      $region78: #{tpu_custom_call.1} parent=63 // loop_exit
        _
      %v1310 = vmul.f32 %v704, 0.00390625
      %v1311 = vld [vmem:[%s5] sm:$0xff]
      %v1312 = vld [vmem:[%s5 + $0x8] sm:$0xff]
      %v1313 = vld [vmem:[%s6] sm:$0x1]
      %v1315 = vsel %vm395, %v1310, 0
      %1317 = vmatpush.msra.mxu0 0.0
      %1318 = vmatpush.msra.mxu0 0.0
      %1319 = vmatpush.msra.mxu0 0.0
      %1320 = vmatpush.msra.mxu0 0.0
      %1321 = vmatpush.msra.mxu0 0.0
      %1322 = vmatpush.msra.mxu0 0.0
      %1323 = vmatpush.msra.mxu0 0.0
      %1324 = vmatpush.msra.mxu0 0.0
      %1325 = vmatpush.msra.mxu0 0.0
      %1326 = vmatpush.msra.mxu0 0.0
      %1327 = vmatpush.msra.mxu0 0.0
      %1328 = vmatpush.msra.mxu0 0.0
      %1329 = vmatpush.msra.mxu0 0.0
      %1330 = vmatpush.msra.mxu0 0.0
      %1331 = vmatpush.msra.mxu0 %v1312
      %1332 = vmatpush.msra.mxu0 %v1311
      %1333 = vmatmul.f32.gmra.mxu0 %v1315
      %v1334 = vpop.f32.mrf.mxu0
      %v1335 = vadd.f32 %v1313, %v1334
      %1336 = vdwg.mxu0
      %v1337 = vmax.f32 %v1335, 0.0
      %v1338 = vld [vmem:[%s7] sm:$0xf]
      %v1339 = vld [vmem:[%s8] sm:$0x1]
      %vm1340 = vcmask 31744
      %v1342 = vsel %vm1340, %v1337, 0
      %vm1344 = vcmask 1043456
      %v1346 = vsel %vm1344, %v1338, 0
      %1348 = vmatpush.msra.mxu0 0.0
      %1349 = vmatpush.msra.mxu0 0.0
      %1350 = vmatpush.msra.mxu0 0.0
      %1351 = vmatpush.msra.mxu0 0.0
      %1352 = vmatpush.msra.mxu0 0.0
      %1353 = vmatpush.msra.mxu0 0.0
      %1354 = vmatpush.msra.mxu0 0.0
      %1355 = vmatpush.msra.mxu0 0.0
      %1356 = vmatpush.msra.mxu0 0.0
      %1357 = vmatpush.msra.mxu0 0.0
      %1358 = vmatpush.msra.mxu0 0.0
      %1359 = vmatpush.msra.mxu0 0.0
      %1360 = vmatpush.msra.mxu0 0.0
      %1361 = vmatpush.msra.mxu0 0.0
      %1362 = vmatpush.msra.mxu0 0.0
      %1363 = vmatpush.msra.mxu0 %v1346
      %1364 = vmatmul.f32.gmra.mxu0 %v1342
      %v1365 = vpop.f32.mrf.mxu0
      %v1366 = vadd.f32 %v1339, %v1365
      %1367 = vdwg.mxu0
      %v1368 = vmul.f32 %v1366, 0.16666667
      %v1369 = vadd.f32 %v1368, 0.5
      %v1370 = vmax.f32 %v1369, 0.0
      %v1371 = vmin.f32 %v1370, 1.0
      loop: start=0, step=1, limit=2
      $region79: #{tpu_custom_call.1} parent=63 // loop_pre_header
        _
      $region80: #{tpu_custom_call.1} parent=63 // loop_header
        %s1373 = sphi 0, %s1377
        %p1374 = scmp.ge.s32.totalorder %s1373, 2
      $region81: #{tpu_custom_call.1} parent=63 // loop_header_branch
        %1376 = sbr.rel (%p1374) target = $region85
      $region82: #{tpu_custom_call.1} parent=63 // loop_body
        %s1378 = smul.u32 %s1373, 8
        %s1379 = smul.u32 %s1378, 16
        %s1380 = scalar_lea.vmem [#allocation3], %s1379
        %v1381 = vld [vmem:[%s1380] sm:$0xff]
        %v1382 = vld [vmem:[%s1380 + $0x8] sm:$0xff]
        %v1383 = vld [vmem:[%s1380 + $0x10] sm:$0xff]
        %v1384 = vld [vmem:[%s1380 + $0x18] sm:$0xff]
        %v1385 = vld [vmem:[%s1380 + $0x20] sm:$0xff]
        %v1386 = vld [vmem:[%s1380 + $0x28] sm:$0xff]
        %v1387 = vld [vmem:[%s1380 + $0x30] sm:$0xff]
        %v1388 = vld [vmem:[%s1380 + $0x38] sm:$0xff]
        %v1389 = vld [vmem:[%s1380 + $0x40] sm:$0xff]
        %v1390 = vld [vmem:[%s1380 + $0x48] sm:$0xff]
        %v1391 = vld [vmem:[%s1380 + $0x50] sm:$0xff]
        %v1392 = vld [vmem:[%s1380 + $0x58] sm:$0xff]
        %v1393 = vld [vmem:[%s1380 + $0x60] sm:$0xff]
        %v1394 = vld [vmem:[%s1380 + $0x68] sm:$0xff]
        %v1395 = vld [vmem:[%s1380 + $0x70] sm:$0xff]
        %v1396 = vld [vmem:[%s1380 + $0x78] sm:$0xff]
        %v1397 = vperm.slane %v1371, 0
        %v1398 = vmul.f32 %v1381, %v1397
        %v1399 = vmul.f32 %v1382, %v1397
        %v1400 = vmul.f32 %v1383, %v1397
        %v1401 = vmul.f32 %v1384, %v1397
        %v1402 = vmul.f32 %v1385, %v1397
        %v1403 = vmul.f32 %v1386, %v1397
        %v1404 = vmul.f32 %v1387, %v1397
        %v1405 = vmul.f32 %v1388, %v1397
        %v1406 = vmul.f32 %v1389, %v1397
        %v1407 = vmul.f32 %v1390, %v1397
        %v1408 = vmul.f32 %v1391, %v1397
        %v1409 = vmul.f32 %v1392, %v1397
        %v1410 = vmul.f32 %v1393, %v1397
        %v1411 = vmul.f32 %v1394, %v1397
        %v1412 = vmul.f32 %v1395, %v1397
        %v1413 = vmul.f32 %v1396, %v1397
        %v1415 = vperm.slane %v394, 0
        %v1418 = vsel %vm395, %v1398, 0
        %v1421 = vsel %vm395, %v1399, 0
        %v1424 = vsel %vm395, %v1400, 0
        %v1427 = vsel %vm395, %v1401, 0
        %v1430 = vsel %vm395, %v1402, 0
        %v1433 = vsel %vm395, %v1403, 0
        %v1436 = vsel %vm395, %v1404, 0
        %v1439 = vsel %vm395, %v1405, 0
        %v1442 = vsel %vm395, %v1406, 0
        %v1445 = vsel %vm395, %v1407, 0
        %v1448 = vsel %vm395, %v1408, 0
        %v1451 = vsel %vm395, %v1409, 0
        %v1454 = vsel %vm395, %v1410, 0
        %v1457 = vsel %vm395, %v1411, 0
        %v1460 = vsel %vm395, %v1412, 0
        %v1463 = vsel %vm395, %v1413, 0
        %1465 = vmatpush.msra.mxu0 0.0
        %1466 = vmatpush.msra.mxu0 0.0
        %1467 = vmatpush.msra.mxu0 0.0
        %1468 = vmatpush.msra.mxu0 0.0
        %1469 = vmatpush.msra.mxu0 0.0
        %1470 = vmatpush.msra.mxu0 0.0
        %1471 = vmatpush.msra.mxu0 0.0
        %1472 = vmatpush.msra.mxu0 0.0
        %1473 = vmatpush.msra.mxu0 0.0
        %1474 = vmatpush.msra.mxu0 0.0
        %1475 = vmatpush.msra.mxu0 0.0
        %1476 = vmatpush.msra.mxu0 0.0
        %1477 = vmatpush.msra.mxu0 0.0
        %1478 = vmatpush.msra.mxu0 0.0
        %1479 = vmatpush.msra.mxu0 %v393
        %1480 = vmatpush.msra.mxu0 %v392
        %1481 = vmatmul.f32.gmra.mxu0 %v1418
        %v1482 = vpop.f32.mrf.mxu0
        %v1483 = vadd.f32 %v1415, %v1482
        %1484 = vmatmul.f32.gmra.mxu0 %v1421
        %v1485 = vpop.f32.mrf.mxu0
        %v1486 = vadd.f32 %v1415, %v1485
        %1487 = vmatmul.f32.gmra.mxu0 %v1424
        %v1488 = vpop.f32.mrf.mxu0
        %v1489 = vadd.f32 %v1415, %v1488
        %1490 = vmatmul.f32.gmra.mxu0 %v1427
        %v1491 = vpop.f32.mrf.mxu0
        %v1492 = vadd.f32 %v1415, %v1491
        %1493 = vmatmul.f32.gmra.mxu0 %v1430
        %v1494 = vpop.f32.mrf.mxu0
        %v1495 = vadd.f32 %v1415, %v1494
        %1496 = vmatmul.f32.gmra.mxu0 %v1433
        %v1497 = vpop.f32.mrf.mxu0
        %v1498 = vadd.f32 %v1415, %v1497
        %1499 = vmatmul.f32.gmra.mxu0 %v1436
        %v1500 = vpop.f32.mrf.mxu0
        %v1501 = vadd.f32 %v1415, %v1500
        %1502 = vmatmul.f32.gmra.mxu0 %v1439
        %v1503 = vpop.f32.mrf.mxu0
        %v1504 = vadd.f32 %v1415, %v1503
        %1505 = vmatmul.f32.gmra.mxu0 %v1442
        %v1506 = vpop.f32.mrf.mxu0
        %v1507 = vadd.f32 %v1415, %v1506
        %1508 = vmatmul.f32.gmra.mxu0 %v1445
        %v1509 = vpop.f32.mrf.mxu0
        %v1510 = vadd.f32 %v1415, %v1509
        %1511 = vmatmul.f32.gmra.mxu0 %v1448
        %v1512 = vpop.f32.mrf.mxu0
        %v1513 = vadd.f32 %v1415, %v1512
        %1514 = vmatmul.f32.gmra.mxu0 %v1451
        %v1515 = vpop.f32.mrf.mxu0
        %v1516 = vadd.f32 %v1415, %v1515
        %1517 = vmatmul.f32.gmra.mxu0 %v1454
        %v1518 = vpop.f32.mrf.mxu0
        %v1519 = vadd.f32 %v1415, %v1518
        %1520 = vmatmul.f32.gmra.mxu0 %v1457
        %v1521 = vpop.f32.mrf.mxu0
        %v1522 = vadd.f32 %v1415, %v1521
        %1523 = vmatmul.f32.gmra.mxu0 %v1460
        %v1524 = vpop.f32.mrf.mxu0
        %v1525 = vadd.f32 %v1415, %v1524
        %1526 = vmatmul.f32.gmra.mxu0 %v1463
        %v1527 = vpop.f32.mrf.mxu0
        %v1528 = vadd.f32 %v1415, %v1527
        %1529 = vdwg.mxu0
        %s1530 = scalar_lea.vmem %s381, %s1379
        %v1531 = vld [vmem:[%s1530] sm:$0xff]
        %v1532 = vld [vmem:[%s1530 + $0x8] sm:$0xff]
        %v1533 = vld [vmem:[%s1530 + $0x10] sm:$0xff]
        %v1534 = vld [vmem:[%s1530 + $0x18] sm:$0xff]
        %v1535 = vld [vmem:[%s1530 + $0x20] sm:$0xff]
        %v1536 = vld [vmem:[%s1530 + $0x28] sm:$0xff]
        %v1537 = vld [vmem:[%s1530 + $0x30] sm:$0xff]
        %v1538 = vld [vmem:[%s1530 + $0x38] sm:$0xff]
        %v1539 = vld [vmem:[%s1530 + $0x40] sm:$0xff]
        %v1540 = vld [vmem:[%s1530 + $0x48] sm:$0xff]
        %v1541 = vld [vmem:[%s1530 + $0x50] sm:$0xff]
        %v1542 = vld [vmem:[%s1530 + $0x58] sm:$0xff]
        %v1543 = vld [vmem:[%s1530 + $0x60] sm:$0xff]
        %v1544 = vld [vmem:[%s1530 + $0x68] sm:$0xff]
        %v1545 = vld [vmem:[%s1530 + $0x70] sm:$0xff]
        %v1546 = vld [vmem:[%s1530 + $0x78] sm:$0xff]
        %v1547 = vadd.f32 %v1483, %v1531
        %v1548 = vadd.f32 %v1486, %v1532
        %v1549 = vadd.f32 %v1489, %v1533
        %v1550 = vadd.f32 %v1492, %v1534
        %v1551 = vadd.f32 %v1495, %v1535
        %v1552 = vadd.f32 %v1498, %v1536
        %v1553 = vadd.f32 %v1501, %v1537
        %v1554 = vadd.f32 %v1504, %v1538
        %v1555 = vadd.f32 %v1507, %v1539
        %v1556 = vadd.f32 %v1510, %v1540
        %v1557 = vadd.f32 %v1513, %v1541
        %v1558 = vadd.f32 %v1516, %v1542
        %v1559 = vadd.f32 %v1519, %v1543
        %v1560 = vadd.f32 %v1522, %v1544
        %v1561 = vadd.f32 %v1525, %v1545
        %v1562 = vadd.f32 %v1528, %v1546
        %s1563 = scalar_lea.vmem %s386, %s1379
        %vm1564 = vcmask 64512
        %1565 = vst.msk [vmem:[%s1563] sm:$0xff] %vm1564, %v1547
        %1566 = vst.msk [vmem:[%s1563 + $0x8] sm:$0xff] %vm1564, %v1548
        %1567 = vst.msk [vmem:[%s1563 + $0x10] sm:$0xff] %vm1564, %v1549
        %1568 = vst.msk [vmem:[%s1563 + $0x18] sm:$0xff] %vm1564, %v1550
        %1569 = vst.msk [vmem:[%s1563 + $0x20] sm:$0xff] %vm1564, %v1551
        %1570 = vst.msk [vmem:[%s1563 + $0x28] sm:$0xff] %vm1564, %v1552
        %1571 = vst.msk [vmem:[%s1563 + $0x30] sm:$0xff] %vm1564, %v1553
        %1572 = vst.msk [vmem:[%s1563 + $0x38] sm:$0xff] %vm1564, %v1554
        %1573 = vst.msk [vmem:[%s1563 + $0x40] sm:$0xff] %vm1564, %v1555
        %1574 = vst.msk [vmem:[%s1563 + $0x48] sm:$0xff] %vm1564, %v1556
        %1575 = vst.msk [vmem:[%s1563 + $0x50] sm:$0xff] %vm1564, %v1557
        %1576 = vst.msk [vmem:[%s1563 + $0x58] sm:$0xff] %vm1564, %v1558
        %1577 = vst.msk [vmem:[%s1563 + $0x60] sm:$0xff] %vm1564, %v1559
        %1578 = vst.msk [vmem:[%s1563 + $0x68] sm:$0xff] %vm1564, %v1560
        %1579 = vst.msk [vmem:[%s1563 + $0x70] sm:$0xff] %vm1564, %v1561
        %1580 = vst.msk [vmem:[%s1563 + $0x78] sm:$0xff] %vm1564, %v1562
      $region83: #{tpu_custom_call.1} parent=63 // loop_footer
        %s1377 = sadd.s32 1, %s1373
      $region84: #{tpu_custom_call.1} parent=63 // loop_footer_branch
        %1372 = sbr.rel target = $region80
      $region85: #{tpu_custom_call.1} parent=63 // loop_exit
        _
      %p1581 = scmp.lt.s32.totalorder %s22, 1
      %s1582 = scalar_select %p1581, %s22, 1
      %s1583 = smul.addr %s1582, 32
      %s1584 = smul.addr %s1583, 8
      %s1585 = scalar_lea.vmem %s11, %s1584
      // Predicated region
      $region86: #{tpu_custom_call.1} parent=63 // pred_check
        %p1586 = pneg %p276
      $region87: #{tpu_custom_call.1} parent=63 // pred_check_branch
        %1588 = sbr.rel (%p1586) target = $region89
      $region88: #{tpu_custom_call.1} parent=63 // pred_region
        _
      $region89: #{tpu_custom_call.1} parent=63 // pred_fallthru
        _
    $region64: #{tpu_custom_call.1} parent=5 // pred_fallthru
      _
    %p1589 = scmp.le.s32.totalorder 2, %s17
    // Predicated region
    $region90: #{tpu_custom_call.1} parent=5 // pred_check
      %p1590 = pneg %p1589
    $region91: #{tpu_custom_call.1} parent=5 // pred_check_branch
      %1592 = sbr.rel (%p1590) target = $region93
    $region92: #{tpu_custom_call.1} parent=5 // pred_region
      %s1593 = ssub.s32 %s17, 2
      // Predicated region
      $region94: #{tpu_custom_call.1} parent=92 // pred_check
        %p1594 = pneg %p282
      $region95: #{tpu_custom_call.1} parent=92 // pred_check_branch
        %1596 = sbr.rel (%p1594) target = $region97
      $region96: #{tpu_custom_call.1} parent=92 // pred_region
        %p1597 = scmp.lt.s32.totalorder %s23, 1
        %s1598 = scalar_select %p1597, %s23, 1
        %s1599 = smul.addr %s1598, 32
        %s1600 = smul.addr %s1599, 8
        %s1601 = scalar_lea.vmem %s11, %s1600
      $region97: #{tpu_custom_call.1} parent=92 // pred_fallthru
        _
    $region93: #{tpu_custom_call.1} parent=5 // pred_fallthru
      _
  $region6: #{tpu_custom_call.1} parent=0 // loop_footer
    %s21 = sadd.s32 1, %s17
  $region7: #{tpu_custom_call.1} parent=0 // loop_footer_branch
    %16 = sbr.rel target = $region3
  $region8: #{tpu_custom_call.1} parent=0 // loop_exit
    _

</llo_original>
